<compile_context>
chip_gen: v5e
topology: v5e:2x2
jax: 0.10.0
libtpu: 0.0.40
codegen_flags: <defaults>
</compile_context>

<pallas_src>
import jax
import jax.numpy as jnp
from jax.experimental import pallas as pl
from jax.experimental.pallas import tpu as pltpu


# ----------------------------------------------------------------------------
# Host-side (shape/weight-derived) constant packing
# ----------------------------------------------------------------------------
def _interp_matrix(size_in, size_out):
    """Row-stochastic bilinear matrix M (size_out, size_in), align_corners=True."""
    if size_in == 1:
        return jnp.ones((size_out, 1), jnp.float32)
    scale = (size_in - 1) / (size_out - 1)
    src = jnp.arange(size_out, dtype=jnp.float32) * scale
    i0 = jnp.clip(jnp.floor(src).astype(jnp.int32), 0, size_in - 1)
    i1 = jnp.clip(i0 + 1, 0, size_in - 1)
    frac = src - i0.astype(jnp.float32)
    cols = jnp.arange(size_in)
    m0 = (cols[None, :] == i0[:, None]).astype(jnp.float32) * (1.0 - frac)[:, None]
    m1 = (cols[None, :] == i1[:, None]).astype(jnp.float32) * frac[:, None]
    return m0 + m1


def _build_band_stack(w_oihw, W):
    """Fold the 3x3 conv's dx-window + channel mix into banded matrices.

    w_oihw: (Cout, Cin, 3, 3) PyTorch layout.
    Returns B of shape (3, (W+2)*Cin, W*Cout) with
      B[dy, p*Cin + ci, j*Cout + co] = w[co, ci, dy, p - j]  for p-j in {0,1,2}
    so that  out_row[i] = sum_dy  x_padded_row[i+dy] @ B[dy]   (row = (pixel, ch)).
    """
    Cout, Cin, KH, KW = w_oihw.shape
    P = W + 2
    p = jnp.arange(P)[:, None, None]
    j = jnp.arange(W)[None, :, None]
    dx = jnp.arange(KW)[None, None, :]
    T = (p == j + dx).astype(w_oihw.dtype)                      # (P, W, KW)
    B = jnp.einsum("pjx,oiyx->ypijo", T, w_oihw)                # (KH, P, Cin, W, Cout)
    return B.reshape(KH, P * Cin, W * Cout)


# ----------------------------------------------------------------------------
# Fused unetUp kernel (NHWC-flat interface, zero layout ops)
# ----------------------------------------------------------------------------
def unet_up_apply_nhwc(x1_nhwc, x2_nhwc, w1, b1, w2, b2,
                       compute_dtype=jnp.float32):
    """x1_nhwc: (N,H,W,C1), x2_nhwc: (N,H/2,W/2,C2) -> (N,H,W,Cout).

    compute_dtype: matmul-operand dtype (accumulation is always f32).  Use
    jnp.bfloat16 on v6e/v7x at realistic channel counts.
    """
    N, H, W, C1 = x1_nhwc.shape
    _, h, w_, C2 = x2_nhwc.shape
    assert h * 2 == H and w_ * 2 == W
    Cout, Cin = w1.shape[0], w1.shape[1]
    assert Cin == C1 + C2
    f32 = jnp.float32

    # Banded conv weights (block-Toeplitz over the W axis), split by input source
    # (concat order in the PyTorch module is [inputs1, up(inputs2)]).
    B1x = _build_band_stack(w1[:, :C1], W).astype(compute_dtype)   # (3,(W+2)*C1, W*Cout)
    B1u = _build_band_stack(w1[:, C1:], W).astype(compute_dtype)   # (3,(W+2)*C2, W*Cout)
    B2 = _build_band_stack(w2, W).astype(compute_dtype)            # (3,(W+2)*Cout,W*Cout)
    b1row = jnp.tile(b1, W).reshape(1, W * Cout).astype(f32)
    b2row = jnp.tile(b2, W).reshape(1, W * Cout).astype(f32)

    # Bilinear x2 (align_corners=True) as two matmuls: rows via Lh, columns via
    # KwT = kron(Lw, I_C2)^T acting on the channel-minor flattened row layout.
    Lh = _interp_matrix(h, H).astype(compute_dtype)                         # (H, h)
    Lw = _interp_matrix(w_, W)                                              # (W, w)
    KwT = jnp.einsum("jq,cd->qcjd", Lw, jnp.eye(C2, dtype=f32))
    KwT = KwT.reshape(w_ * C2, W * C2).astype(compute_dtype)

    # NHWC -> (N, rows, pixel*channel) flattening is free (trailing dims).
    x1f = x1_nhwc.reshape(N, H, W * C1).astype(compute_dtype)
    x2f = x2_nhwc.reshape(N, h, w_ * C2).astype(compute_dtype)

    def kernel(x1_ref, x2_ref, kwT_ref, lh_ref, b1x_ref, b1u_ref, b1v_ref,
               b2w_ref, b2v_ref, o_ref, x1pad, u2pad, midpad):
        # Zero the padded scratches (keeps the 1-pixel halo at zero each step).
        x1pad[...] = jnp.zeros_like(x1pad)
        u2pad[...] = jnp.zeros_like(u2pad)
        midpad[...] = jnp.zeros_like(midpad)

        # Skip-connection features -> interior of padded im2row scratch.
        x1pad[pl.ds(1, H), pl.ds(C1, W * C1)] = x1_ref[0]

        # In-VMEM bilinear x2 upsample (align_corners=True): two matmuls.
        yw = jnp.dot(x2_ref[0], kwT_ref[...], preferred_element_type=f32)   # (h, W*C2)
        up = jnp.dot(lh_ref[...], yw, preferred_element_type=f32)           # (H, W*C2)
        u2pad[pl.ds(1, H), pl.ds(C2, W * C2)] = up.astype(u2pad.dtype)

        # conv1 (3x3, pad=1) + bias + ReLU: 6 banded matmuls, lane-dense acc.
        acc = jnp.zeros((H, W * Cout), f32)
        for dy in range(3):
            acc += jnp.dot(x1pad[pl.ds(dy, H), :], b1x_ref[dy],
                           preferred_element_type=f32)
            acc += jnp.dot(u2pad[pl.ds(dy, H), :], b1u_ref[dy],
                           preferred_element_type=f32)
        acc = jnp.maximum(acc + b1v_ref[...], 0.0)
        midpad[pl.ds(1, H), pl.ds(Cout, W * Cout)] = acc.astype(midpad.dtype)

        # conv2 (3x3, pad=1) + bias + ReLU.
        acc2 = jnp.zeros((H, W * Cout), f32)
        for dy in range(3):
            acc2 += jnp.dot(midpad[pl.ds(dy, H), :], b2w_ref[dy],
                            preferred_element_type=f32)
        o_ref[0] = jnp.maximum(acc2 + b2v_ref[...], 0.0).astype(o_ref.dtype)

    out = pl.pallas_call(
        kernel,
        out_shape=jax.ShapeDtypeStruct((N, H, W * Cout), x1_nhwc.dtype),
        grid=(N,),
        in_specs=[
            pl.BlockSpec((1, H, W * C1), lambda n: (n, 0, 0)),
            pl.BlockSpec((1, h, w_ * C2), lambda n: (n, 0, 0)),
            pl.BlockSpec((w_ * C2, W * C2), lambda n: (0, 0)),
            pl.BlockSpec((H, h), lambda n: (0, 0)),
            pl.BlockSpec((3, (W + 2) * C1, W * Cout), lambda n: (0, 0, 0)),
            pl.BlockSpec((3, (W + 2) * C2, W * Cout), lambda n: (0, 0, 0)),
            pl.BlockSpec((1, W * Cout), lambda n: (0, 0)),
            pl.BlockSpec((3, (W + 2) * Cout, W * Cout), lambda n: (0, 0, 0)),
            pl.BlockSpec((1, W * Cout), lambda n: (0, 0)),
        ],
        out_specs=pl.BlockSpec((1, H, W * Cout), lambda n: (n, 0, 0)),
        scratch_shapes=[
            pltpu.VMEM((H + 2, (W + 2) * C1), compute_dtype),
            pltpu.VMEM((H + 2, (W + 2) * C2), compute_dtype),
            pltpu.VMEM((H + 2, (W + 2) * Cout), compute_dtype),
        ],
        compiler_params=pltpu.CompilerParams(
            dimension_semantics=("parallel",),
            # Explicit scoped-VMEM limit (tiny here; stays <= v7x's 64 MiB).
            vmem_limit_bytes=32 * 1024 * 1024),
    )(x1f, x2f, KwT, Lh, B1x, B1u, b1row, B2, b2row)
    return out.reshape(N, H, W, Cout)


# ----------------------------------------------------------------------------
# PyTorch-parity wrapper (NCHW in / NCHW out).  In a real decoder keep NHWC
# end-to-end and call unet_up_apply_nhwc directly (no layout traffic at all).
# ----------------------------------------------------------------------------
def unet_up_forward(inputs1, inputs2, params):
    x1 = jnp.transpose(inputs1, (0, 2, 3, 1))
    x2 = jnp.transpose(inputs2, (0, 2, 3, 1))
    y = unet_up_apply_nhwc(x1, x2, params["w1"], params["b1"],
                           params["w2"], params["b2"])
    return jnp.transpose(y, (0, 3, 1, 2))


def init_params(key, in_size, out_size):
    k1, k2, k3, k4 = jax.random.split(key, 4)
    # PyTorch OIHW layout.
    w1 = 0.05 * jax.random.normal(k1, (out_size, in_size, 3, 3), jnp.float32)
    b1 = 0.05 * jax.random.normal(k2, (out_size,), jnp.float32)
    w2 = 0.05 * jax.random.normal(k3, (out_size, out_size, 3, 3), jnp.float32)
    b2 = 0.05 * jax.random.normal(k4, (out_size,), jnp.float32)
    return {"w1": w1, "b1": b1, "w2": w2, "b2": b2}


# ----------------------------------------------------------------------------
# Pure-JAX reference (for in-script correctness check)
# ----------------------------------------------------------------------------
def _upsample_bilinear_x2_ref(x_nchw):
    N, C, H, W = x_nchw.shape

    def lerp(arr, size_in, axis):
        size_out = 2 * size_in
        if size_in == 1:
            return jnp.repeat(arr, 2, axis=axis)
        scale = (size_in - 1) / (size_out - 1)
        src = jnp.arange(size_out, dtype=jnp.float32) * scale
        i0 = jnp.clip(jnp.floor(src).astype(jnp.int32), 0, size_in - 1)
        i1 = jnp.clip(i0 + 1, 0, size_in - 1)
        frac = (src - i0.astype(jnp.float32)).astype(arr.dtype)
        shp = [1] * arr.ndim
        shp[axis] = size_out
        frac = frac.reshape(shp)
        return (jnp.take(arr, i0, axis=axis) * (1 - frac)
                + jnp.take(arr, i1, axis=axis) * frac)

    x = lerp(x_nchw, H, 2)
    x = lerp(x, W, 3)
    return x


def unet_up_reference(inputs1, inputs2, params):
    x = jnp.concatenate([inputs1, _upsample_bilinear_x2_ref(inputs2)], axis=1)
    y = jax.lax.conv_general_dilated(x, params["w1"], (1, 1), ((1, 1), (1, 1)),
                                     dimension_numbers=("NCHW", "OIHW", "NCHW"))
    y = jnp.maximum(y + params["b1"][None, :, None, None], 0.0)
    y = jax.lax.conv_general_dilated(y, params["w2"], (1, 1), ((1, 1), (1, 1)),
                                     dimension_numbers=("NCHW", "OIHW", "NCHW"))
    y = jnp.maximum(y + params["b2"][None, :, None, None], 0.0)
    return y


if __name__ == "__main__":
    key = jax.random.PRNGKey(0)
    k_in1, k_in2, k_par = jax.random.split(key, 3)

    N, C1, H, W = 2, 4, 16, 16      # skip-connection features (full res)
    C2 = 4                          # decoder features (half res) -> upsampled
    in_size = C1 + C2               # 8
    out_size = 8

    inputs1 = jax.random.normal(k_in1, (N, C1, H, W), jnp.float32)
    inputs2 = jax.random.normal(k_in2, (N, C2, H // 2, W // 2), jnp.float32)
    params = init_params(k_par, in_size, out_size)

    fwd = jax.jit(unet_up_forward)
    out = jax.block_until_ready(fwd(inputs1, inputs2, params))
    assert out.shape == (N, out_size, H, W)
    assert bool(jnp.all(out >= 0.0))  # ReLU output

    ref = jax.block_until_ready(unet_up_reference(inputs1, inputs2, params))
    max_err = float(jnp.max(jnp.abs(out - ref)))
    assert max_err < 5e-2, f"mismatch vs pure-JAX reference: {max_err}"

    print("KERNEL_OK")
</pallas_src>

<mosaic_0001>
module attributes {stable_mosaic.version = 11 : i64} {
  func.func @kernel(%arg0: i32, %arg1: memref<1x16x64xf32, #tpu.memory_space<vmem>>, %arg2: memref<1x8x32xf32, #tpu.memory_space<vmem>>, %arg3: memref<32x64xf32, #tpu.memory_space<vmem>>, %arg4: memref<16x8xf32, #tpu.memory_space<vmem>>, %arg5: memref<3x72x128xf32, #tpu.memory_space<vmem>>, %arg6: memref<3x72x128xf32, #tpu.memory_space<vmem>>, %arg7: memref<1x128xf32, #tpu.memory_space<vmem>>, %arg8: memref<3x144x128xf32, #tpu.memory_space<vmem>>, %arg9: memref<1x128xf32, #tpu.memory_space<vmem>>, %arg10: memref<1x16x128xf32, #tpu.memory_space<vmem>>, %arg11: memref<18x72xf32, #tpu.memory_space<vmem>>, %arg12: memref<18x72xf32, #tpu.memory_space<vmem>>, %arg13: memref<18x144xf32, #tpu.memory_space<vmem>>) attributes {dimension_semantics = [#tpu.dimension_semantics<parallel>], iteration_bounds = array<i64: 2>, scalar_prefetch = 0 : i64, scratch_operands = 3 : i64, tpu.core_type = #tpu.core_type<tc>, window_params = [{transform_indices = @transform_0, window_bounds = array<i64: 1, 16, 64>}, {transform_indices = @transform_1, window_bounds = array<i64: 1, 8, 32>}, {pipeline_mode = #tpu.pipeline_mode<synchronous>, transform_indices = @transform_2, window_bounds = array<i64: 32, 64>}, {pipeline_mode = #tpu.pipeline_mode<synchronous>, transform_indices = @transform_3, window_bounds = array<i64: 16, 8>}, {pipeline_mode = #tpu.pipeline_mode<synchronous>, transform_indices = @transform_4, window_bounds = array<i64: 3, 72, 128>}, {pipeline_mode = #tpu.pipeline_mode<synchronous>, transform_indices = @transform_5, window_bounds = array<i64: 3, 72, 128>}, {pipeline_mode = #tpu.pipeline_mode<synchronous>, transform_indices = @transform_6, window_bounds = array<i64: 1, 128>}, {pipeline_mode = #tpu.pipeline_mode<synchronous>, transform_indices = @transform_7, window_bounds = array<i64: 3, 144, 128>}, {pipeline_mode = #tpu.pipeline_mode<synchronous>, transform_indices = @transform_8, window_bounds = array<i64: 1, 128>}, {transform_indices = @transform_9, window_bounds = array<i64: 1, 16, 128>}]} {
    %cst = arith.constant 0.000000e+00 : f32
    %0 = vector.broadcast %cst : f32 to vector<18x72xf32>
    %c0 = arith.constant 0 : index
    %c0_0 = arith.constant 0 : index
    %1 = vector.load %arg11[%c0, %c0_0] : memref<18x72xf32, #tpu.memory_space<vmem>>, vector<18x72xf32>
    tpu.vector_store %arg11[%c0, %c0_0], %0 {strides = array<i32>} : memref<18x72xf32, #tpu.memory_space<vmem>>, vector<18x72xf32>,
    %cst_1 = arith.constant 0.000000e+00 : f32
    %2 = vector.broadcast %cst_1 : f32 to vector<18x72xf32>
    %c0_2 = arith.constant 0 : index
    %c0_3 = arith.constant 0 : index
    %3 = vector.load %arg12[%c0_2, %c0_3] : memref<18x72xf32, #tpu.memory_space<vmem>>, vector<18x72xf32>
    tpu.vector_store %arg12[%c0_2, %c0_3], %2 {strides = array<i32>} : memref<18x72xf32, #tpu.memory_space<vmem>>, vector<18x72xf32>,
    %cst_4 = arith.constant 0.000000e+00 : f32
    %4 = vector.broadcast %cst_4 : f32 to vector<18x144xf32>
    %c0_5 = arith.constant 0 : index
    %c0_6 = arith.constant 0 : index
    %5 = vector.load %arg13[%c0_5, %c0_6] : memref<18x144xf32, #tpu.memory_space<vmem>>, vector<18x144xf32>
    tpu.vector_store %arg13[%c0_5, %c0_6], %4 {strides = array<i32>} : memref<18x144xf32, #tpu.memory_space<vmem>>, vector<18x144xf32>,
    %c0_7 = arith.constant 0 : index
    %c0_8 = arith.constant 0 : index
    %c0_9 = arith.constant 0 : index
    %6 = vector.load %arg1[%c0_7, %c0_8, %c0_9] : memref<1x16x64xf32, #tpu.memory_space<vmem>>, vector<1x16x64xf32>
    %7 = vector.shape_cast %6 : vector<1x16x64xf32> to vector<16x64xf32>
    %c1 = arith.constant 1 : index
    %c4 = arith.constant 4 : index
    %8 = vector.load %arg11[%c1, %c4] : memref<18x72xf32, #tpu.memory_space<vmem>>, vector<16x64xf32>
    tpu.vector_store %arg11[%c1, %c4], %7 {strides = array<i32>} : memref<18x72xf32, #tpu.memory_space<vmem>>, vector<16x64xf32>,
    %c0_10 = arith.constant 0 : index
    %c0_11 = arith.constant 0 : index
    %c0_12 = arith.constant 0 : index
    %9 = vector.load %arg2[%c0_10, %c0_11, %c0_12] : memref<1x8x32xf32, #tpu.memory_space<vmem>>, vector<1x8x32xf32>
    %10 = vector.shape_cast %9 : vector<1x8x32xf32> to vector<8x32xf32>
    %c0_13 = arith.constant 0 : index
    %c0_14 = arith.constant 0 : index
    %11 = vector.load %arg3[%c0_13, %c0_14] : memref<32x64xf32, #tpu.memory_space<vmem>>, vector<32x64xf32>
    %cst_15 = arith.constant dense<0.000000e+00> : vector<8x64xf32>
    %12 = tpu.matmul %10, %11, %cst_15 {dimension_numbers = #tpu.dot_dimension_numbers<[1], [0], [0], [1], [0, 0, 1, 1], [], []>} : vector<8x32xf32>, vector<32x64xf32>, vector<8x64xf32> -> vector<8x64xf32>
    %c0_16 = arith.constant 0 : index
    %c0_17 = arith.constant 0 : index
    %13 = vector.load %arg4[%c0_16, %c0_17] : memref<16x8xf32, #tpu.memory_space<vmem>>, vector<16x8xf32>
    %cst_18 = arith.constant dense<0.000000e+00> : vector<16x64xf32>
    %14 = tpu.matmul %13, %12, %cst_18 {dimension_numbers = #tpu.dot_dimension_numbers<[1], [0], [0], [1], [0, 0, 1, 1], [], []>} : vector<16x8xf32>, vector<8x64xf32>, vector<16x64xf32> -> vector<16x64xf32>
    %c1_19 = arith.constant 1 : index
    %c4_20 = arith.constant 4 : index
    %15 = vector.load %arg12[%c1_19, %c4_20] : memref<18x72xf32, #tpu.memory_space<vmem>>, vector<16x64xf32>
    tpu.vector_store %arg12[%c1_19, %c4_20], %14 {strides = array<i32>} : memref<18x72xf32, #tpu.memory_space<vmem>>, vector<16x64xf32>,
    %cst_21 = arith.constant 0.000000e+00 : f32
    %16 = vector.broadcast %cst_21 : f32 to vector<16x128xf32>
    %c0_22 = arith.constant 0 : index
    %c0_23 = arith.constant 0 : index
    %17 = vector.load %arg11[%c0_22, %c0_23] : memref<18x72xf32, #tpu.memory_space<vmem>>, vector<16x72xf32>
    %c0_24 = arith.constant 0 : index
    %c0_25 = arith.constant 0 : index
    %c0_26 = arith.constant 0 : index
    %18 = vector.load %arg5[%c0_24, %c0_25, %c0_26] : memref<3x72x128xf32, #tpu.memory_space<vmem>>, vector<1x72x128xf32>
    %19 = vector.shape_cast %18 : vector<1x72x128xf32> to vector<72x128xf32>
    %cst_27 = arith.constant dense<0.000000e+00> : vector<16x128xf32>
    %20 = tpu.matmul %17, %19, %cst_27 {dimension_numbers = #tpu.dot_dimension_numbers<[1], [0], [0], [1], [0, 0, 1, 1], [], []>} : vector<16x72xf32>, vector<72x128xf32>, vector<16x128xf32> -> vector<16x128xf32>
    %21 = arith.addf %16, %20 : vector<16x128xf32>
    %c0_28 = arith.constant 0 : index
    %c0_29 = arith.constant 0 : index
    %22 = vector.load %arg12[%c0_28, %c0_29] : memref<18x72xf32, #tpu.memory_space<vmem>>, vector<16x72xf32>
    %c0_30 = arith.constant 0 : index
    %c0_31 = arith.constant 0 : index
    %c0_32 = arith.constant 0 : index
    %23 = vector.load %arg6[%c0_30, %c0_31, %c0_32] : memref<3x72x128xf32, #tpu.memory_space<vmem>>, vector<1x72x128xf32>
    %24 = vector.shape_cast %23 : vector<1x72x128xf32> to vector<72x128xf32>
    %cst_33 = arith.constant dense<0.000000e+00> : vector<16x128xf32>
    %25 = tpu.matmul %22, %24, %cst_33 {dimension_numbers = #tpu.dot_dimension_numbers<[1], [0], [0], [1], [0, 0, 1, 1], [], []>} : vector<16x72xf32>, vector<72x128xf32>, vector<16x128xf32> -> vector<16x128xf32>
    %26 = arith.addf %21, %25 : vector<16x128xf32>
    %c1_34 = arith.constant 1 : index
    %c0_35 = arith.constant 0 : index
    %27 = vector.load %arg11[%c1_34, %c0_35] : memref<18x72xf32, #tpu.memory_space<vmem>>, vector<16x72xf32>
    %c1_36 = arith.constant 1 : index
    %c0_37 = arith.constant 0 : index
    %c0_38 = arith.constant 0 : index
    %28 = vector.load %arg5[%c1_36, %c0_37, %c0_38] : memref<3x72x128xf32, #tpu.memory_space<vmem>>, vector<1x72x128xf32>
    %29 = vector.shape_cast %28 : vector<1x72x128xf32> to vector<72x128xf32>
    %cst_39 = arith.constant dense<0.000000e+00> : vector<16x128xf32>
    %30 = tpu.matmul %27, %29, %cst_39 {dimension_numbers = #tpu.dot_dimension_numbers<[1], [0], [0], [1], [0, 0, 1, 1], [], []>} : vector<16x72xf32>, vector<72x128xf32>, vector<16x128xf32> -> vector<16x128xf32>
    %31 = arith.addf %26, %30 : vector<16x128xf32>
    %c1_40 = arith.constant 1 : index
    %c0_41 = arith.constant 0 : index
    %32 = vector.load %arg12[%c1_40, %c0_41] : memref<18x72xf32, #tpu.memory_space<vmem>>, vector<16x72xf32>
    %c1_42 = arith.constant 1 : index
    %c0_43 = arith.constant 0 : index
    %c0_44 = arith.constant 0 : index
    %33 = vector.load %arg6[%c1_42, %c0_43, %c0_44] : memref<3x72x128xf32, #tpu.memory_space<vmem>>, vector<1x72x128xf32>
    %34 = vector.shape_cast %33 : vector<1x72x128xf32> to vector<72x128xf32>
    %cst_45 = arith.constant dense<0.000000e+00> : vector<16x128xf32>
    %35 = tpu.matmul %32, %34, %cst_45 {dimension_numbers = #tpu.dot_dimension_numbers<[1], [0], [0], [1], [0, 0, 1, 1], [], []>} : vector<16x72xf32>, vector<72x128xf32>, vector<16x128xf32> -> vector<16x128xf32>
    %36 = arith.addf %31, %35 : vector<16x128xf32>
    %c2 = arith.constant 2 : index
    %c0_46 = arith.constant 0 : index
    %37 = vector.load %arg11[%c2, %c0_46] : memref<18x72xf32, #tpu.memory_space<vmem>>, vector<16x72xf32>
    %c2_47 = arith.constant 2 : index
    %c0_48 = arith.constant 0 : index
    %c0_49 = arith.constant 0 : index
    %38 = vector.load %arg5[%c2_47, %c0_48, %c0_49] : memref<3x72x128xf32, #tpu.memory_space<vmem>>, vector<1x72x128xf32>
    %39 = vector.shape_cast %38 : vector<1x72x128xf32> to vector<72x128xf32>
    %cst_50 = arith.constant dense<0.000000e+00> : vector<16x128xf32>
    %40 = tpu.matmul %37, %39, %cst_50 {dimension_numbers = #tpu.dot_dimension_numbers<[1], [0], [0], [1], [0, 0, 1, 1], [], []>} : vector<16x72xf32>, vector<72x128xf32>, vector<16x128xf32> -> vector<16x128xf32>
    %41 = arith.addf %36, %40 : vector<16x128xf32>
    %c2_51 = arith.constant 2 : index
    %c0_52 = arith.constant 0 : index
    %42 = vector.load %arg12[%c2_51, %c0_52] : memref<18x72xf32, #tpu.memory_space<vmem>>, vector<16x72xf32>
    %c2_53 = arith.constant 2 : index
    %c0_54 = arith.constant 0 : index
    %c0_55 = arith.constant 0 : index
    %43 = vector.load %arg6[%c2_53, %c0_54, %c0_55] : memref<3x72x128xf32, #tpu.memory_space<vmem>>, vector<1x72x128xf32>
    %44 = vector.shape_cast %43 : vector<1x72x128xf32> to vector<72x128xf32>
    %cst_56 = arith.constant dense<0.000000e+00> : vector<16x128xf32>
    %45 = tpu.matmul %42, %44, %cst_56 {dimension_numbers = #tpu.dot_dimension_numbers<[1], [0], [0], [1], [0, 0, 1, 1], [], []>} : vector<16x72xf32>, vector<72x128xf32>, vector<16x128xf32> -> vector<16x128xf32>
    %46 = arith.addf %41, %45 : vector<16x128xf32>
    %c0_57 = arith.constant 0 : index
    %c0_58 = arith.constant 0 : index
    %47 = vector.load %arg7[%c0_57, %c0_58] : memref<1x128xf32, #tpu.memory_space<vmem>>, vector<1x128xf32>
    %48 = vector.broadcast %47 : vector<1x128xf32> to vector<16x128xf32>
    %49 = arith.addf %46, %48 : vector<16x128xf32>
    %cst_59 = arith.constant 0.000000e+00 : f32
    %50 = vector.broadcast %cst_59 : f32 to vector<16x128xf32>
    %51 = arith.maximumf %49, %50 : vector<16x128xf32>
    %c1_60 = arith.constant 1 : index
    %c8 = arith.constant 8 : index
    %52 = vector.load %arg13[%c1_60, %c8] : memref<18x144xf32, #tpu.memory_space<vmem>>, vector<16x128xf32>
    tpu.vector_store %arg13[%c1_60, %c8], %51 {strides = array<i32>} : memref<18x144xf32, #tpu.memory_space<vmem>>, vector<16x128xf32>,
    %cst_61 = arith.constant 0.000000e+00 : f32
    %53 = vector.broadcast %cst_61 : f32 to vector<16x128xf32>
    %c0_62 = arith.constant 0 : index
    %c0_63 = arith.constant 0 : index
    %54 = vector.load %arg13[%c0_62, %c0_63] : memref<18x144xf32, #tpu.memory_space<vmem>>, vector<16x144xf32>
    %c0_64 = arith.constant 0 : index
    %c0_65 = arith.constant 0 : index
    %c0_66 = arith.constant 0 : index
    %55 = vector.load %arg8[%c0_64, %c0_65, %c0_66] : memref<3x144x128xf32, #tpu.memory_space<vmem>>, vector<1x144x128xf32>
    %56 = vector.shape_cast %55 : vector<1x144x128xf32> to vector<144x128xf32>
    %cst_67 = arith.constant dense<0.000000e+00> : vector<16x128xf32>
    %57 = tpu.matmul %54, %56, %cst_67 {dimension_numbers = #tpu.dot_dimension_numbers<[1], [0], [0], [1], [0, 0, 1, 1], [], []>} : vector<16x144xf32>, vector<144x128xf32>, vector<16x128xf32> -> vector<16x128xf32>
    %58 = arith.addf %53, %57 : vector<16x128xf32>
    %c1_68 = arith.constant 1 : index
    %c0_69 = arith.constant 0 : index
    %59 = vector.load %arg13[%c1_68, %c0_69] : memref<18x144xf32, #tpu.memory_space<vmem>>, vector<16x144xf32>
    %c1_70 = arith.constant 1 : index
    %c0_71 = arith.constant 0 : index
    %c0_72 = arith.constant 0 : index
    %60 = vector.load %arg8[%c1_70, %c0_71, %c0_72] : memref<3x144x128xf32, #tpu.memory_space<vmem>>, vector<1x144x128xf32>
    %61 = vector.shape_cast %60 : vector<1x144x128xf32> to vector<144x128xf32>
    %cst_73 = arith.constant dense<0.000000e+00> : vector<16x128xf32>
    %62 = tpu.matmul %59, %61, %cst_73 {dimension_numbers = #tpu.dot_dimension_numbers<[1], [0], [0], [1], [0, 0, 1, 1], [], []>} : vector<16x144xf32>, vector<144x128xf32>, vector<16x128xf32> -> vector<16x128xf32>
    %63 = arith.addf %58, %62 : vector<16x128xf32>
    %c2_74 = arith.constant 2 : index
    %c0_75 = arith.constant 0 : index
    %64 = vector.load %arg13[%c2_74, %c0_75] : memref<18x144xf32, #tpu.memory_space<vmem>>, vector<16x144xf32>
    %c2_76 = arith.constant 2 : index
    %c0_77 = arith.constant 0 : index
    %c0_78 = arith.constant 0 : index
    %65 = vector.load %arg8[%c2_76, %c0_77, %c0_78] : memref<3x144x128xf32, #tpu.memory_space<vmem>>, vector<1x144x128xf32>
    %66 = vector.shape_cast %65 : vector<1x144x128xf32> to vector<144x128xf32>
    %cst_79 = arith.constant dense<0.000000e+00> : vector<16x128xf32>
    %67 = tpu.matmul %64, %66, %cst_79 {dimension_numbers = #tpu.dot_dimension_numbers<[1], [0], [0], [1], [0, 0, 1, 1], [], []>} : vector<16x144xf32>, vector<144x128xf32>, vector<16x128xf32> -> vector<16x128xf32>
    %68 = arith.addf %63, %67 : vector<16x128xf32>
    %c0_80 = arith.constant 0 : index
    %c0_81 = arith.constant 0 : index
    %69 = vector.load %arg9[%c0_80, %c0_81] : memref<1x128xf32, #tpu.memory_space<vmem>>, vector<1x128xf32>
    %70 = vector.broadcast %69 : vector<1x128xf32> to vector<16x128xf32>
    %71 = arith.addf %68, %70 : vector<16x128xf32>
    %cst_82 = arith.constant 0.000000e+00 : f32
    %72 = vector.broadcast %cst_82 : f32 to vector<16x128xf32>
    %73 = arith.maximumf %71, %72 : vector<16x128xf32>
    %c0_83 = arith.constant 0 : index
    %c0_84 = arith.constant 0 : index
    %c0_85 = arith.constant 0 : index
    %74 = vector.load %arg10[%c0_83, %c0_84, %c0_85] : memref<1x16x128xf32, #tpu.memory_space<vmem>>, vector<1x16x128xf32>
    %75 = vector.shape_cast %74 : vector<1x16x128xf32> to vector<16x128xf32>
    %76 = vector.shape_cast %73 : vector<16x128xf32> to vector<1x16x128xf32>
    tpu.vector_store %arg10[%c0_83, %c0_84, %c0_85], %76 {strides = array<i32>} : memref<1x16x128xf32, #tpu.memory_space<vmem>>, vector<1x16x128xf32>,
    return
  }
  func.func @transform_0(%arg0: i32) -> (i32, i32, i32) {
    %c0_i32 = arith.constant 0 : i32
    %c0_i32_0 = arith.constant 0 : i32
    %c0_i32_1 = arith.constant 0 : i32
    return %arg0, %c0_i32, %c0_i32_0 : i32, i32, i32
  }
  func.func @transform_1(%arg0: i32) -> (i32, i32, i32) {
    %c0_i32 = arith.constant 0 : i32
    %c0_i32_0 = arith.constant 0 : i32
    %c0_i32_1 = arith.constant 0 : i32
    return %arg0, %c0_i32, %c0_i32_0 : i32, i32, i32
  }
  func.func @transform_2(%arg0: i32) -> (i32, i32) {
    %c0_i32 = arith.constant 0 : i32
    %c0_i32_0 = arith.constant 0 : i32
    %c0_i32_1 = arith.constant 0 : i32
    return %c0_i32, %c0_i32_0 : i32, i32
  }
  func.func @transform_3(%arg0: i32) -> (i32, i32) {
    %c0_i32 = arith.constant 0 : i32
    %c0_i32_0 = arith.constant 0 : i32
    %c0_i32_1 = arith.constant 0 : i32
    return %c0_i32, %c0_i32_0 : i32, i32
  }
  func.func @transform_4(%arg0: i32) -> (i32, i32, i32) {
    %c0_i32 = arith.constant 0 : i32
    %c0_i32_0 = arith.constant 0 : i32
    %c0_i32_1 = arith.constant 0 : i32
    %c0_i32_2 = arith.constant 0 : i32
    return %c0_i32, %c0_i32_0, %c0_i32_1 : i32, i32, i32
  }
  func.func @transform_5(%arg0: i32) -> (i32, i32, i32) {
    %c0_i32 = arith.constant 0 : i32
    %c0_i32_0 = arith.constant 0 : i32
    %c0_i32_1 = arith.constant 0 : i32
    %c0_i32_2 = arith.constant 0 : i32
    return %c0_i32, %c0_i32_0, %c0_i32_1 : i32, i32, i32
  }
  func.func @transform_6(%arg0: i32) -> (i32, i32) {
    %c0_i32 = arith.constant 0 : i32
    %c0_i32_0 = arith.constant 0 : i32
    %c0_i32_1 = arith.constant 0 : i32
    return %c0_i32, %c0_i32_0 : i32, i32
  }
  func.func @transform_7(%arg0: i32) -> (i32, i32, i32) {
    %c0_i32 = arith.constant 0 : i32
    %c0_i32_0 = arith.constant 0 : i32
    %c0_i32_1 = arith.constant 0 : i32
    %c0_i32_2 = arith.constant 0 : i32
    return %c0_i32, %c0_i32_0, %c0_i32_1 : i32, i32, i32
  }
  func.func @transform_8(%arg0: i32) -> (i32, i32) {
    %c0_i32 = arith.constant 0 : i32
    %c0_i32_0 = arith.constant 0 : i32
    %c0_i32_1 = arith.constant 0 : i32
    return %c0_i32, %c0_i32_0 : i32, i32
  }
  func.func @transform_9(%arg0: i32) -> (i32, i32, i32) {
    %c0_i32 = arith.constant 0 : i32
    %c0_i32_0 = arith.constant 0 : i32
    %c0_i32_1 = arith.constant 0 : i32
    return %arg0, %c0_i32, %c0_i32_0 : i32, i32, i32
  }
}

</mosaic_0001>

<llo_original>
// kernel: tile.13
$region0: #{tile.13}
  #allocation0 [shape = 's32[1]{0}', space=sflag, size = 0x4, scoped, tag = 'scoped memory for tile.13']
  %s0 = inlined_call_operand.vmem [shape: f32[8], index: 0, kind: input, shape index: {}]
  %s1 = inlined_call_operand.vmem [shape: f32[16,8], index: 1, kind: output, shape index: {}]
  // Predicated region
  $region2: #{tile.13} parent=0 // pred_check
    _
  $region3: #{tile.13} parent=0 // pred_check_branch
    %3 = sbr.rel (0) target = $region5
  $region4: #{tile.13} parent=0 // pred_region
    _
  $region5: #{tile.13} parent=0 // pred_fallthru
    _
  %v4 = vld [vmem:[%s0] ss:$0 sm:$0xff]
  %5 = vst [vmem:[%s1] sm:$0xff] %v4
  %s6 = scalar_lea.vmem %s1, 8
  %7 = vst [vmem:[%s6] sm:$0xff] %v4

// kernel: tile.14
$region0: #{tile.14}
  %s0 = inlined_call_operand.vmem [shape: f32[16,8], index: 0, kind: input, shape index: {}]
  %s1 = inlined_call_operand.vmem [shape: f32[1,128], index: 1, kind: output, shape index: {}]
  $region1: #{tile.14} parent=0
    #allocation0 [shape = 'u8[4096]{0}', space=vmem, size = 0x1000, scoped, tag = 'scoped mem for output reshape']
    %v2 = vld [vmem:[%s0] sm:$0x1]
    %vm3 = vcmask 64512
    %4 = vst.msk [vmem:[#allocation0] sm:$0x1] %vm3, %v2
    %s5 = scalar_lea.vmem %s0, 15
    %v6 = vld [vmem:[%s5] sm:$0x1]
    %7 = vrot.lane.b32.xlu0 %v6, 120
    %v8 = vpop.permute.xlu0 %7
    %vm9 = vcmask 1048512
    %10 = vst.msk [vmem:[#allocation0] sm:$0x1] %vm9, %v8
    %s11 = scalar_lea.vmem %s0, 14
    %v12 = vld [vmem:[%s11] sm:$0x1]
    %13 = vrot.lane.b32.xlu0 %v12, 112
    %v14 = vpop.permute.xlu0 %13
    %vm15 = vcmask 982912
    %16 = vst.msk [vmem:[#allocation0] sm:$0x1] %vm15, %v14
    %s17 = scalar_lea.vmem %s0, 13
    %v18 = vld [vmem:[%s17] sm:$0x1]
    %19 = vrot.lane.b32.xlu0 %v18, 104
    %v20 = vpop.permute.xlu0 %19
    %vm21 = vcmask 917312
    %22 = vst.msk [vmem:[#allocation0] sm:$0x1] %vm21, %v20
    %s23 = scalar_lea.vmem %s0, 12
    %v24 = vld [vmem:[%s23] sm:$0x1]
    %25 = vrot.lane.b32.xlu0 %v24, 96
    %v26 = vpop.permute.xlu0 %25
    %vm27 = vcmask 851712
    %28 = vst.msk [vmem:[#allocation0] sm:$0x1] %vm27, %v26
    %s29 = scalar_lea.vmem %s0, 11
    %v30 = vld [vmem:[%s29] sm:$0x1]
    %31 = vrot.lane.b32.xlu0 %v30, 88
    %v32 = vpop.permute.xlu0 %31
    %vm33 = vcmask 786112
    %34 = vst.msk [vmem:[#allocation0] sm:$0x1] %vm33, %v32
    %s35 = scalar_lea.vmem %s0, 10
    %v36 = vld [vmem:[%s35] sm:$0x1]
    %37 = vrot.lane.b32.xlu0 %v36, 80
    %v38 = vpop.permute.xlu0 %37
    %vm39 = vcmask 720512
    %40 = vst.msk [vmem:[#allocation0] sm:$0x1] %vm39, %v38
    %s41 = scalar_lea.vmem %s0, 9
    %v42 = vld [vmem:[%s41] sm:$0x1]
    %43 = vrot.lane.b32.xlu0 %v42, 72
    %v44 = vpop.permute.xlu0 %43
    %vm45 = vcmask 654912
    %46 = vst.msk [vmem:[#allocation0] sm:$0x1] %vm45, %v44
    %s47 = scalar_lea.vmem %s0, 8
    %v48 = vld [vmem:[%s47] sm:$0x1]
    %49 = vrot.lane.b32.xlu0 %v48, 64
    %v50 = vpop.permute.xlu0 %49
    %vm51 = vcmask 589312
    %52 = vst.msk [vmem:[#allocation0] sm:$0x1] %vm51, %v50
    %s53 = scalar_lea.vmem %s0, 7
    %v54 = vld [vmem:[%s53] sm:$0x1]
    %55 = vrot.lane.b32.xlu0 %v54, 56
    %v56 = vpop.permute.xlu0 %55
    %vm57 = vcmask 523712
    %58 = vst.msk [vmem:[#allocation0] sm:$0x1] %vm57, %v56
    %s59 = scalar_lea.vmem %s0, 6
    %v60 = vld [vmem:[%s59] sm:$0x1]
    %61 = vrot.lane.b32.xlu0 %v60, 48
    %v62 = vpop.permute.xlu0 %61
    %vm63 = vcmask 458112
    %64 = vst.msk [vmem:[#allocation0] sm:$0x1] %vm63, %v62
    %s65 = scalar_lea.vmem %s0, 5
    %v66 = vld [vmem:[%s65] sm:$0x1]
    %67 = vrot.lane.b32.xlu0 %v66, 40
    %v68 = vpop.permute.xlu0 %67
    %vm69 = vcmask 392512
    %70 = vst.msk [vmem:[#allocation0] sm:$0x1] %vm69, %v68
    %s71 = scalar_lea.vmem %s0, 4
    %v72 = vld [vmem:[%s71] sm:$0x1]
    %73 = vrot.lane.b32.xlu0 %v72, 32
    %v74 = vpop.permute.xlu0 %73
    %vm75 = vcmask 326912
    %76 = vst.msk [vmem:[#allocation0] sm:$0x1] %vm75, %v74
    %s77 = scalar_lea.vmem %s0, 3
    %v78 = vld [vmem:[%s77] sm:$0x1]
    %79 = vrot.lane.b32.xlu0 %v78, 24
    %v80 = vpop.permute.xlu0 %79
    %vm81 = vcmask 261312
    %82 = vst.msk [vmem:[#allocation0] sm:$0x1] %vm81, %v80
    %s83 = scalar_lea.vmem %s0, 2
    %v84 = vld [vmem:[%s83] sm:$0x1]
    %85 = vrot.lane.b32.xlu0 %v84, 16
    %v86 = vpop.permute.xlu0 %85
    %vm87 = vcmask 195712
    %88 = vst.msk [vmem:[#allocation0] sm:$0x1] %vm87, %v86
    %s89 = scalar_lea.vmem %s0, 1
    %v90 = vld [vmem:[%s89] sm:$0x1]
    %91 = vrot.lane.b32.xlu0 %v90, 8
    %v92 = vpop.permute.xlu0 %91
    %vm93 = vcmask 130112
    %94 = vst.msk [vmem:[#allocation0] sm:$0x1] %vm93, %v92
    %s96 = ssub.s32 2, 1
    %v97 = vld [vmem:[#allocation0] sm:%s96]
    %s99 = ssub.s32 2, 1
    %100 = vst [vmem:[%s1] sm:%s99] %v97

// kernel: unet_up_forward.1
$region0: #{unet_up_forward.1}
  #allocation0 [shape = 'u32[]', space=smem, size = 0x4, offset = 0x4, fixed_abs, tag = 'smem constant byte address 0x4 - core index']
  #allocation1 [shape = 'u32[72,128]{1,0:T(1,128)}', space=vmem, size = 0x9000, scoped, tag = 'internal scratch']
  #allocation2 [shape = 'f32[18,72]{1,0:T(8,128)}', space=vmem, size = 0x3000, scoped, tag = 'scratch operand']
  #allocation3 [shape = 'f32[18,72]{1,0:T(8,128)}', space=vmem, size = 0x3000, scoped, tag = 'scratch operand']
  #allocation4 [shape = 'f32[18,144]{1,0:T(8,128)}', space=vmem, size = 0x6000, scoped, tag = 'scratch operand']
  %s0 = inlined_call_operand.vmem [shape: f32[2,16,64], index: 0, kind: input, shape index: {}]
  %s1 = inlined_call_operand.vmem [shape: f32[2,8,32], index: 1, kind: input, shape index: {}]
  %s2 = inlined_call_operand.vmem [shape: f32[32,64], index: 2, kind: input, shape index: {}]
  %s3 = inlined_call_operand.vmem [shape: f32[16,8], index: 3, kind: input, shape index: {}]
  %s4 = inlined_call_operand.vmem [shape: f32[3,72,128], index: 4, kind: input, shape index: {}]
  %s5 = inlined_call_operand.vmem [shape: f32[3,72,128], index: 5, kind: input, shape index: {}]
  %s6 = inlined_call_operand.vmem [shape: f32[1,128], index: 6, kind: input, shape index: {}]
  %s7 = inlined_call_operand.vmem [shape: f32[3,144,128], index: 7, kind: input, shape index: {}]
  %s8 = inlined_call_operand.vmem [shape: f32[1,128], index: 8, kind: input, shape index: {}]
  %s9 = inlined_call_operand.vmem [shape: f32[2,16,128], index: 9, kind: output, shape index: {}]
  %s10 = sld [smem:[#allocation0]]
  $region69: #{unet_up_forward.1} parent=0
    _
  %s12 = ssub.s32 1, %s10
  %s13 = scalar_select 0, %s12, %s10
  loop: start=0, step=1, limit=4
  $region2: #{unet_up_forward.1} parent=0 // loop_pre_header
    _
  $region3: #{unet_up_forward.1} parent=0 // loop_header
    %s15 = sphi 0, %s19
    %p16 = scmp.ge.s32.totalorder %s15, 4
    %s25 = sphi 0, %s27
    %s28 = sphi 0, %s25
    %s29 = sphi 0, %s28
    %s45 = sphi 0, %s29
    %s51 = sphi 0, %s53
    %s54 = sphi 0, %s51
    %s55 = sphi 0, %s54
    %s71 = sphi 0, %s55
    %s75 = sphi 0, %s75
    %s77 = sphi 0, %s75
    %s78 = sphi 0, %s77
    %s92 = sphi 0, %s78
    %s96 = sphi 0, %s96
    %s98 = sphi 0, %s96
    %s99 = sphi 0, %s98
    %s113 = sphi 0, %s99
    %s117 = sphi 0, %s117
    %s119 = sphi 0, %s117
    %s120 = sphi 0, %s119
    %s134 = sphi 0, %s120
    %s138 = sphi 0, %s138
    %s140 = sphi 0, %s138
    %s141 = sphi 0, %s140
    %s155 = sphi 0, %s141
    %s159 = sphi 0, %s159
    %s161 = sphi 0, %s159
    %s162 = sphi 0, %s161
    %s176 = sphi 0, %s162
    %s180 = sphi 0, %s180
    %s182 = sphi 0, %s180
    %s183 = sphi 0, %s182
    %s197 = sphi 0, %s183
    %s201 = sphi 0, %s201
    %s203 = sphi 0, %s201
    %s204 = sphi 0, %s203
    %s218 = sphi 0, %s204
    %s224 = sphi 0, %s226
    %s227 = sphi 0, %s224
    %s228 = sphi 0, %s227
    %s244 = sphi 0, %s228
  $region4: #{unet_up_forward.1} parent=0 // loop_header_branch
    %18 = sbr.rel (%p16) target = $region8
  $region5: #{unet_up_forward.1} parent=0 // loop_body
    %s20 = ssub.s32 %s15, 1
    %s21 = ssub.s32 %s15, 2
    %s22 = sadd.s32 %s15, 1
    %s23 = ssub.s32 %s15, %s22
    %p24 = scmp.eq.s32.totalorder %s23, 0
    %s26 = sadd.s32 %s25, 1
    %s27 = scalar_select %p24, %s25, %s26
    %p30 = pneg %p24
    %p31 = scmp.eq.s32.totalorder %s15, 1
    %p32 = por %p30, %p31
    %p33 = scmp.ne.s32.totalorder %s25, %s28
    %p34 = scmp.eq.s32.totalorder %s15, 0
    %p35 = por %p33, %p34
    %p36 = scmp.ne.s32.totalorder %s25, %s28
    %p37 = scmp.eq.s32.totalorder %s20, 1
    %p38 = por %p36, %p37
    %p39 = scmp.ne.s32.totalorder %s28, %s29
    %p40 = scmp.eq.s32.totalorder %s20, 0
    %p41 = por %p39, %p40
    %p42 = scmp.ne.s32.totalorder %s28, %s29
    %p43 = scmp.eq.s32.totalorder %s21, 1
    %p44 = por %p42, %p43
    %p46 = scmp.ne.s32.totalorder %s29, %s45
    %p47 = scmp.eq.s32.totalorder %s21, 0
    %p48 = por %p46, %p47
    %s49 = ssub.s32 %s15, %s22
    %p50 = scmp.eq.s32.totalorder %s49, 0
    %s52 = sadd.s32 %s51, 1
    %s53 = scalar_select %p50, %s51, %s52
    %p56 = pneg %p50
    %p57 = scmp.eq.s32.totalorder %s15, 1
    %p58 = por %p56, %p57
    %p59 = scmp.ne.s32.totalorder %s51, %s54
    %p60 = scmp.eq.s32.totalorder %s15, 0
    %p61 = por %p59, %p60
    %p62 = scmp.ne.s32.totalorder %s51, %s54
    %p63 = scmp.eq.s32.totalorder %s20, 1
    %p64 = por %p62, %p63
    %p65 = scmp.ne.s32.totalorder %s54, %s55
    %p66 = scmp.eq.s32.totalorder %s20, 0
    %p67 = por %p65, %p66
    %p68 = scmp.ne.s32.totalorder %s54, %s55
    %p69 = scmp.eq.s32.totalorder %s21, 1
    %p70 = por %p68, %p69
    %p72 = scmp.ne.s32.totalorder %s55, %s71
    %p73 = scmp.eq.s32.totalorder %s21, 0
    %p74 = por %p72, %p73
    %s76 = sadd.s32 %s75, 1
    %p79 = scmp.eq.s32.totalorder %s15, 1
    %p80 = scmp.ne.s32.totalorder %s75, %s77
    %p81 = scmp.eq.s32.totalorder %s15, 0
    %p82 = por %p80, %p81
    %p83 = scmp.ne.s32.totalorder %s75, %s77
    %p84 = scmp.eq.s32.totalorder %s20, 1
    %p85 = por %p83, %p84
    %p86 = scmp.ne.s32.totalorder %s77, %s78
    %p87 = scmp.eq.s32.totalorder %s20, 0
    %p88 = por %p86, %p87
    %p89 = scmp.ne.s32.totalorder %s77, %s78
    %p90 = scmp.eq.s32.totalorder %s21, 1
    %p91 = por %p89, %p90
    %p93 = scmp.ne.s32.totalorder %s78, %s92
    %p94 = scmp.eq.s32.totalorder %s21, 0
    %p95 = por %p93, %p94
    %s97 = sadd.s32 %s96, 1
    %p100 = scmp.eq.s32.totalorder %s15, 1
    %p101 = scmp.ne.s32.totalorder %s96, %s98
    %p102 = scmp.eq.s32.totalorder %s15, 0
    %p103 = por %p101, %p102
    %p104 = scmp.ne.s32.totalorder %s96, %s98
    %p105 = scmp.eq.s32.totalorder %s20, 1
    %p106 = por %p104, %p105
    %p107 = scmp.ne.s32.totalorder %s98, %s99
    %p108 = scmp.eq.s32.totalorder %s20, 0
    %p109 = por %p107, %p108
    %p110 = scmp.ne.s32.totalorder %s98, %s99
    %p111 = scmp.eq.s32.totalorder %s21, 1
    %p112 = por %p110, %p111
    %p114 = scmp.ne.s32.totalorder %s99, %s113
    %p115 = scmp.eq.s32.totalorder %s21, 0
    %p116 = por %p114, %p115
    %s118 = sadd.s32 %s117, 1
    %p121 = scmp.eq.s32.totalorder %s15, 1
    %p122 = scmp.ne.s32.totalorder %s117, %s119
    %p123 = scmp.eq.s32.totalorder %s15, 0
    %p124 = por %p122, %p123
    %p125 = scmp.ne.s32.totalorder %s117, %s119
    %p126 = scmp.eq.s32.totalorder %s20, 1
    %p127 = por %p125, %p126
    %p128 = scmp.ne.s32.totalorder %s119, %s120
    %p129 = scmp.eq.s32.totalorder %s20, 0
    %p130 = por %p128, %p129
    %p131 = scmp.ne.s32.totalorder %s119, %s120
    %p132 = scmp.eq.s32.totalorder %s21, 1
    %p133 = por %p131, %p132
    %p135 = scmp.ne.s32.totalorder %s120, %s134
    %p136 = scmp.eq.s32.totalorder %s21, 0
    %p137 = por %p135, %p136
    %s139 = sadd.s32 %s138, 1
    %p142 = scmp.eq.s32.totalorder %s15, 1
    %p143 = scmp.ne.s32.totalorder %s138, %s140
    %p144 = scmp.eq.s32.totalorder %s15, 0
    %p145 = por %p143, %p144
    %p146 = scmp.ne.s32.totalorder %s138, %s140
    %p147 = scmp.eq.s32.totalorder %s20, 1
    %p148 = por %p146, %p147
    %p149 = scmp.ne.s32.totalorder %s140, %s141
    %p150 = scmp.eq.s32.totalorder %s20, 0
    %p151 = por %p149, %p150
    %p152 = scmp.ne.s32.totalorder %s140, %s141
    %p153 = scmp.eq.s32.totalorder %s21, 1
    %p154 = por %p152, %p153
    %p156 = scmp.ne.s32.totalorder %s141, %s155
    %p157 = scmp.eq.s32.totalorder %s21, 0
    %p158 = por %p156, %p157
    %s160 = sadd.s32 %s159, 1
    %p163 = scmp.eq.s32.totalorder %s15, 1
    %p164 = scmp.ne.s32.totalorder %s159, %s161
    %p165 = scmp.eq.s32.totalorder %s15, 0
    %p166 = por %p164, %p165
    %p167 = scmp.ne.s32.totalorder %s159, %s161
    %p168 = scmp.eq.s32.totalorder %s20, 1
    %p169 = por %p167, %p168
    %p170 = scmp.ne.s32.totalorder %s161, %s162
    %p171 = scmp.eq.s32.totalorder %s20, 0
    %p172 = por %p170, %p171
    %p173 = scmp.ne.s32.totalorder %s161, %s162
    %p174 = scmp.eq.s32.totalorder %s21, 1
    %p175 = por %p173, %p174
    %p177 = scmp.ne.s32.totalorder %s162, %s176
    %p178 = scmp.eq.s32.totalorder %s21, 0
    %p179 = por %p177, %p178
    %s181 = sadd.s32 %s180, 1
    %p184 = scmp.eq.s32.totalorder %s15, 1
    %p185 = scmp.ne.s32.totalorder %s180, %s182
    %p186 = scmp.eq.s32.totalorder %s15, 0
    %p187 = por %p185, %p186
    %p188 = scmp.ne.s32.totalorder %s180, %s182
    %p189 = scmp.eq.s32.totalorder %s20, 1
    %p190 = por %p188, %p189
    %p191 = scmp.ne.s32.totalorder %s182, %s183
    %p192 = scmp.eq.s32.totalorder %s20, 0
    %p193 = por %p191, %p192
    %p194 = scmp.ne.s32.totalorder %s182, %s183
    %p195 = scmp.eq.s32.totalorder %s21, 1
    %p196 = por %p194, %p195
    %p198 = scmp.ne.s32.totalorder %s183, %s197
    %p199 = scmp.eq.s32.totalorder %s21, 0
    %p200 = por %p198, %p199
    %s202 = sadd.s32 %s201, 1
    %p205 = scmp.eq.s32.totalorder %s15, 1
    %p206 = scmp.ne.s32.totalorder %s201, %s203
    %p207 = scmp.eq.s32.totalorder %s15, 0
    %p208 = por %p206, %p207
    %p209 = scmp.ne.s32.totalorder %s201, %s203
    %p210 = scmp.eq.s32.totalorder %s20, 1
    %p211 = por %p209, %p210
    %p212 = scmp.ne.s32.totalorder %s203, %s204
    %p213 = scmp.eq.s32.totalorder %s20, 0
    %p214 = por %p212, %p213
    %p215 = scmp.ne.s32.totalorder %s203, %s204
    %p216 = scmp.eq.s32.totalorder %s21, 1
    %p217 = por %p215, %p216
    %p219 = scmp.ne.s32.totalorder %s204, %s218
    %p220 = scmp.eq.s32.totalorder %s21, 0
    %p221 = por %p219, %p220
    %s222 = ssub.s32 %s15, %s22
    %p223 = scmp.eq.s32.totalorder %s222, 0
    %s225 = sadd.s32 %s224, 1
    %s226 = scalar_select %p223, %s224, %s225
    %p229 = pneg %p223
    %p230 = scmp.eq.s32.totalorder %s15, 1
    %p231 = por %p229, %p230
    %p232 = scmp.ne.s32.totalorder %s224, %s227
    %p233 = scmp.eq.s32.totalorder %s15, 0
    %p234 = por %p232, %p233
    %p235 = scmp.ne.s32.totalorder %s224, %s227
    %p236 = scmp.eq.s32.totalorder %s20, 1
    %p237 = por %p235, %p236
    %p238 = scmp.ne.s32.totalorder %s227, %s228
    %p239 = scmp.eq.s32.totalorder %s20, 0
    %p240 = por %p238, %p239
    %p241 = scmp.ne.s32.totalorder %s227, %s228
    %p242 = scmp.eq.s32.totalorder %s21, 1
    %p243 = por %p241, %p242
    %p245 = scmp.ne.s32.totalorder %s228, %s244
    %p246 = scmp.eq.s32.totalorder %s21, 0
    %p247 = por %p245, %p246
    %p248 = scmp.le.s32.totalorder 1, %s15
    %p249 = scmp.lt.s32.totalorder %s15, 3
    %p250 = pnand %p248, %p249
    %p251 = pneg %p250
    // Predicated region
    $region9: #{unet_up_forward.1} parent=5 // pred_check
      _
    $region10: #{unet_up_forward.1} parent=5 // pred_check_branch
      %253 = sbr.rel (%p250) target = $region12
    $region11: #{unet_up_forward.1} parent=5 // pred_region
      %s254 = ssub.s32 %s15, 1
      // Predicated region
      $region13: #{unet_up_forward.1} parent=11 // pred_check
        %p255 = pneg %p88
      $region14: #{unet_up_forward.1} parent=11 // pred_check_branch
        %257 = sbr.rel (%p255) target = $region16
      $region15: #{unet_up_forward.1} parent=11 // pred_region
        _
      $region16: #{unet_up_forward.1} parent=11 // pred_fallthru
        _
      // Predicated region
      $region17: #{unet_up_forward.1} parent=11 // pred_check
        %p258 = pneg %p109
      $region18: #{unet_up_forward.1} parent=11 // pred_check_branch
        %260 = sbr.rel (%p258) target = $region20
      $region19: #{unet_up_forward.1} parent=11 // pred_region
        _
      $region20: #{unet_up_forward.1} parent=11 // pred_fallthru
        _
      // Predicated region
      $region21: #{unet_up_forward.1} parent=11 // pred_check
        %p261 = pneg %p130
      $region22: #{unet_up_forward.1} parent=11 // pred_check_branch
        %263 = sbr.rel (%p261) target = $region24
      $region23: #{unet_up_forward.1} parent=11 // pred_region
        _
      $region24: #{unet_up_forward.1} parent=11 // pred_fallthru
        _
      // Predicated region
      $region25: #{unet_up_forward.1} parent=11 // pred_check
        %p264 = pneg %p151
      $region26: #{unet_up_forward.1} parent=11 // pred_check_branch
        %266 = sbr.rel (%p264) target = $region28
      $region27: #{unet_up_forward.1} parent=11 // pred_region
        _
      $region28: #{unet_up_forward.1} parent=11 // pred_fallthru
        _
      // Predicated region
      $region29: #{unet_up_forward.1} parent=11 // pred_check
        %p267 = pneg %p172
      $region30: #{unet_up_forward.1} parent=11 // pred_check_branch
        %269 = sbr.rel (%p267) target = $region32
      $region31: #{unet_up_forward.1} parent=11 // pred_region
        _
      $region32: #{unet_up_forward.1} parent=11 // pred_fallthru
        _
      // Predicated region
      $region33: #{unet_up_forward.1} parent=11 // pred_check
        %p270 = pneg %p193
      $region34: #{unet_up_forward.1} parent=11 // pred_check_branch
        %272 = sbr.rel (%p270) target = $region36
      $region35: #{unet_up_forward.1} parent=11 // pred_region
        _
      $region36: #{unet_up_forward.1} parent=11 // pred_fallthru
        _
      // Predicated region
      $region37: #{unet_up_forward.1} parent=11 // pred_check
        %p273 = pneg %p214
      $region38: #{unet_up_forward.1} parent=11 // pred_check_branch
        %275 = sbr.rel (%p273) target = $region40
      $region39: #{unet_up_forward.1} parent=11 // pred_region
        _
      $region40: #{unet_up_forward.1} parent=11 // pred_fallthru
        _
    $region12: #{unet_up_forward.1} parent=5 // pred_fallthru
      _
    %p276 = scmp.lt.s32.totalorder %s15, 2
    // Predicated region
    $region41: #{unet_up_forward.1} parent=5 // pred_check
      %p277 = pneg %p276
    $region42: #{unet_up_forward.1} parent=5 // pred_check_branch
      %279 = sbr.rel (%p277) target = $region44
    $region43: #{unet_up_forward.1} parent=5 // pred_region
      // Predicated region
      $region45: #{unet_up_forward.1} parent=43 // pred_check
        %p280 = pneg %p35
      $region46: #{unet_up_forward.1} parent=43 // pred_check_branch
        %282 = sbr.rel (%p280) target = $region48
      $region47: #{unet_up_forward.1} parent=43 // pred_region
        %p283 = scmp.lt.s32.totalorder %s15, 1
        %s284 = scalar_select %p283, %s15, 1
        %s285 = smul.addr %s284, 2
        %s286 = smul.addr %s285, 8
        %s287 = scalar_lea.vmem %s0, %s286
      $region48: #{unet_up_forward.1} parent=43 // pred_fallthru
        _
      // Predicated region
      $region49: #{unet_up_forward.1} parent=43 // pred_check
        %p288 = pneg %p61
      $region50: #{unet_up_forward.1} parent=43 // pred_check_branch
        %290 = sbr.rel (%p288) target = $region52
      $region51: #{unet_up_forward.1} parent=43 // pred_region
        %p291 = scmp.lt.s32.totalorder %s15, 1
        %s292 = scalar_select %p291, %s15, 1
        %s293 = smul.addr %s292, 8
        %s294 = scalar_lea.vmem %s1, %s293
      $region52: #{unet_up_forward.1} parent=43 // pred_fallthru
        _
    $region44: #{unet_up_forward.1} parent=5 // pred_fallthru
      _
    %p295 = scmp.le.s32.totalorder 1, %s15
    %p296 = scmp.lt.s32.totalorder %s15, 3
    %p297 = pnand %p295, %p296
    %p298 = pneg %p297
    // Predicated region
    $region53: #{unet_up_forward.1} parent=5 // pred_check
      _
    $region54: #{unet_up_forward.1} parent=5 // pred_check_branch
      %300 = sbr.rel (%p297) target = $region56
    $region55: #{unet_up_forward.1} parent=5 // pred_region
      %s301 = ssub.s32 %s15, 1
      %p302 = scmp.lt.s32.totalorder %s20, 1
      %s303 = scalar_select %p302, %s20, 1
      %s304 = smul.addr %s303, 2
      %s305 = smul.addr %s304, 8
      %s306 = scalar_lea.vmem %s0, %s305
      %p307 = pneg %p41
      %p308 = pneg %p38
      %p309 = scmp.lt.s32.totalorder %s20, 1
      %s310 = scalar_select %p309, %s20, 1
      %s311 = smul.addr %s310, 8
      %s312 = scalar_lea.vmem %s1, %s311
      %p313 = pneg %p67
      %p314 = pneg %p64
      %p315 = pneg %p88
      %p316 = pneg %p85
      %p317 = pneg %p109
      %p318 = pneg %p106
      %p319 = pneg %p130
      %p320 = pneg %p127
      %p321 = pneg %p151
      %p322 = pneg %p148
      %p323 = pneg %p172
      %p324 = pneg %p169
      %p325 = pneg %p193
      %p326 = pneg %p190
      %p327 = pneg %p214
      %p328 = pneg %p211
      %p329 = pneg %p240
      %p330 = pneg %p237
      %p331 = scmp.lt.s32.totalorder %s20, 1
      %s332 = scalar_select %p331, %s20, 1
      %s333 = smul.addr %s332, 2
      %s334 = smul.addr %s333, 8
      %s335 = scalar_lea.vmem %s9, %s334
      %p336 = scmp.lt.s32.totalorder %s20, 1
      %s337 = scalar_select %p336, %s20, 1
      %s338 = smul.addr %s337, 2
      %s339 = smul.addr %s338, 8
      %s340 = scalar_lea.vmem %s0, %s339
      %p341 = scmp.lt.s32.totalorder %s20, 1
      %s342 = scalar_select %p341, %s20, 1
      %s343 = smul.addr %s342, 8
      %s344 = scalar_lea.vmem %s1, %s343
      %p345 = scmp.lt.s32.totalorder %s20, 1
      %s346 = scalar_select %p345, %s20, 1
      %s347 = smul.addr %s346, 2
      %s348 = smul.addr %s347, 8
      %s349 = scalar_lea.vmem %s9, %s348
      %vm350 = vcmask 588800
      %351 = vst.msk [vmem:[#allocation2] sm:$0xff] %vm350, 0.0
      %352 = vst.msk [vmem:[#allocation2 + $0x8] sm:$0xff] %vm350, 0.0
      %vm353 = vcmask 582656
      %354 = vst.msk [vmem:[#allocation2 + $0x10] sm:$0x3] %vm353, 0.0
      %355 = vst.msk [vmem:[#allocation3] sm:$0xff] %vm350, 0.0
      %356 = vst.msk [vmem:[#allocation3 + $0x8] sm:$0xff] %vm350, 0.0
      %357 = vst.msk [vmem:[#allocation3 + $0x10] sm:$0x3] %vm353, 0.0
      %358 = vst [vmem:[#allocation4] sm:$0xff] 0.0
      %vm359 = vcmask 130048
      %360 = vst.msk [vmem:[#allocation4 + $0x8] sm:$0xff] %vm359, 0.0
      %361 = vst [vmem:[#allocation4 + $0x10] sm:$0xff] 0.0
      %362 = vst.msk [vmem:[#allocation4 + $0x18] sm:$0xff] %vm359, 0.0
      %363 = vst [vmem:[#allocation4 + $0x20] sm:$0x3] 0.0
      %vm364 = vcmask 123904
      %365 = vst.msk [vmem:[#allocation4 + $0x28] sm:$0x3] %vm364, 0.0
      %v366 = vld [vmem:[%s340] sm:$0xff]
      %v367 = vld [vmem:[%s340 + $0x8] sm:$0xff]
      %370 = vrot.lane.b32.xlu0 %v366, 4
      %v371 = vpop.permute.xlu0 %370
      %372 = vrot.lane.b32.xlu0 %v367, 4
      %v373 = vpop.permute.xlu0 %372
      %vm376 = vcmask 556064
      %377 = vst.msk [vmem:[#allocation2 + $0x1] sm:$0xff] %vm376, %v371
      %378 = vst.msk [vmem:[#allocation2 + $0x9] sm:$0xff] %vm376, %v373
      %v379 = vld [vmem:[%s344] sm:$0xff]
      %v380 = vld [vmem:[%s2] sm:$0xff]
      %v381 = vld [vmem:[%s2 + $0x8] sm:$0xff]
      %v382 = vld [vmem:[%s2 + $0x10] sm:$0xff]
      %v383 = vld [vmem:[%s2 + $0x18] sm:$0xff]
      %vm384 = vcmask 261120
      %v386 = vsel %vm384, %v379, 0
      %388 = vmatpush.msra.mxu0 0.0
      %389 = vmatpush.msra.mxu0 0.0
      %390 = vmatpush.msra.mxu0 0.0
      %391 = vmatpush.msra.mxu0 0.0
      %392 = vmatpush.msra.mxu0 0.0
      %393 = vmatpush.msra.mxu0 0.0
      %394 = vmatpush.msra.mxu0 0.0
      %395 = vmatpush.msra.mxu0 0.0
      %396 = vmatpush.msra.mxu0 0.0
      %397 = vmatpush.msra.mxu0 0.0
      %398 = vmatpush.msra.mxu0 0.0
      %399 = vmatpush.msra.mxu0 0.0
      %400 = vmatpush.msra.mxu0 %v383
      %401 = vmatpush.msra.mxu0 %v382
      %402 = vmatpush.msra.mxu0 %v381
      %403 = vmatpush.msra.mxu0 %v380
      %404 = vmatmul.f32.gmra.mxu0 %v386
      %v405 = vpop.f32.mrf.mxu0
      %v406 = vadd.f32 0.0, %v405
      %407 = vdwg.mxu0
      %v408 = vld [vmem:[%s3] sm:$0xff]
      %v409 = vld [vmem:[%s3 + $0x8] sm:$0xff]
      %vm410 = vcmask 64512
      %v412 = vsel %vm410, %v408, 0
      %v415 = vsel %vm410, %v409, 0
      %417 = vmatpush.msra.mxu0 0.0
      %418 = vmatpush.msra.mxu0 0.0
      %419 = vmatpush.msra.mxu0 0.0
      %420 = vmatpush.msra.mxu0 0.0
      %421 = vmatpush.msra.mxu0 0.0
      %422 = vmatpush.msra.mxu0 0.0
      %423 = vmatpush.msra.mxu0 0.0
      %424 = vmatpush.msra.mxu0 0.0
      %425 = vmatpush.msra.mxu0 0.0
      %426 = vmatpush.msra.mxu0 0.0
      %427 = vmatpush.msra.mxu0 0.0
      %428 = vmatpush.msra.mxu0 0.0
      %429 = vmatpush.msra.mxu0 0.0
      %430 = vmatpush.msra.mxu0 0.0
      %431 = vmatpush.msra.mxu0 0.0
      %432 = vmatpush.msra.mxu0 %v406
      %433 = vmatmul.f32.gmra.mxu0 %v412
      %v434 = vpop.f32.mrf.mxu0
      %v435 = vadd.f32 0.0, %v434
      %436 = vmatmul.f32.gmra.mxu0 %v415
      %v437 = vpop.f32.mrf.mxu0
      %v438 = vadd.f32 0.0, %v437
      %439 = vdwg.mxu0
      %442 = vrot.lane.b32.xlu0 %v435, 4
      %v443 = vpop.permute.xlu0 %442
      %444 = vrot.lane.b32.xlu0 %v438, 4
      %v445 = vpop.permute.xlu0 %444
      %448 = vst.msk [vmem:[#allocation3 + $0x1] sm:$0xff] %vm376, %v443
      %449 = vst.msk [vmem:[#allocation3 + $0x9] sm:$0xff] %vm376, %v445
      %v450 = vld [vmem:[#allocation2] sm:$0xff]
      %v451 = vld [vmem:[#allocation2 + $0x8] sm:$0xff]
      %v452 = vld [vmem:[%s4] sm:$0xff]
      %v453 = vld [vmem:[%s4 + $0x8] sm:$0xff]
      %v454 = vld [vmem:[%s4 + $0x10] sm:$0xff]
      %v455 = vld [vmem:[%s4 + $0x18] sm:$0xff]
      %v456 = vld [vmem:[%s4 + $0x20] sm:$0xff]
      %v457 = vld [vmem:[%s4 + $0x28] sm:$0xff]
      %v458 = vld [vmem:[%s4 + $0x30] sm:$0xff]
      %v459 = vld [vmem:[%s4 + $0x38] sm:$0xff]
      %v460 = vld [vmem:[%s4 + $0x40] sm:$0xff]
      %v461 = vld [vmem:[#allocation3] sm:$0xff]
      %v462 = vld [vmem:[#allocation3 + $0x8] sm:$0xff]
      %v463 = vld [vmem:[%s5] sm:$0xff]
      %v464 = vld [vmem:[%s5 + $0x8] sm:$0xff]
      %v465 = vld [vmem:[%s5 + $0x10] sm:$0xff]
      %v466 = vld [vmem:[%s5 + $0x18] sm:$0xff]
      %v467 = vld [vmem:[%s5 + $0x20] sm:$0xff]
      %v468 = vld [vmem:[%s5 + $0x28] sm:$0xff]
      %v469 = vld [vmem:[%s5 + $0x30] sm:$0xff]
      %v470 = vld [vmem:[%s5 + $0x38] sm:$0xff]
      %v471 = vld [vmem:[%s5 + $0x40] sm:$0xff]
      %v473 = vsel %vm350, %v461, 0
      %v476 = vsel %vm350, %v462, 0
      %478 = vmatpush.msra.mxu0 0.0
      %479 = vmatpush.msra.mxu0 0.0
      %480 = vmatpush.msra.mxu0 0.0
      %481 = vmatpush.msra.mxu0 0.0
      %482 = vmatpush.msra.mxu0 0.0
      %483 = vmatpush.msra.mxu0 0.0
      %484 = vmatpush.msra.mxu0 0.0
      %485 = vmatpush.msra.mxu0 %v471
      %486 = vmatpush.msra.mxu0 %v470
      %487 = vmatpush.msra.mxu0 %v469
      %488 = vmatpush.msra.mxu0 %v468
      %489 = vmatpush.msra.mxu0 %v467
      %490 = vmatpush.msra.mxu0 %v466
      %491 = vmatpush.msra.mxu0 %v465
      %492 = vmatpush.msra.mxu0 %v464
      %493 = vmatpush.msra.mxu0 %v463
      %494 = vmatmul.f32.gmra.mxu0 %v473
      %v495 = vpop.f32.mrf.mxu0
      %v496 = vadd.f32 0.0, %v495
      %497 = vmatmul.f32.gmra.mxu0 %v476
      %v498 = vpop.f32.mrf.mxu0
      %v499 = vadd.f32 0.0, %v498
      %500 = vdwg.mxu0
      %v502 = vsel %vm350, %v450, 0
      %v505 = vsel %vm350, %v451, 0
      %507 = vmatpush.msra.mxu0 0.0
      %508 = vmatpush.msra.mxu0 0.0
      %509 = vmatpush.msra.mxu0 0.0
      %510 = vmatpush.msra.mxu0 0.0
      %511 = vmatpush.msra.mxu0 0.0
      %512 = vmatpush.msra.mxu0 0.0
      %513 = vmatpush.msra.mxu0 0.0
      %514 = vmatpush.msra.mxu0 %v460
      %515 = vmatpush.msra.mxu0 %v459
      %516 = vmatpush.msra.mxu0 %v458
      %517 = vmatpush.msra.mxu0 %v457
      %518 = vmatpush.msra.mxu0 %v456
      %519 = vmatpush.msra.mxu0 %v455
      %520 = vmatpush.msra.mxu0 %v454
      %521 = vmatpush.msra.mxu0 %v453
      %522 = vmatpush.msra.mxu0 %v452
      %523 = vmatmul.f32.gmra.mxu0 %v502
      %v524 = vpop.f32.mrf.mxu0
      %v525 = vadd.f32 %v496, %v524
      %526 = vmatmul.f32.gmra.mxu0 %v505
      %v527 = vpop.f32.mrf.mxu0
      %v528 = vadd.f32 %v499, %v527
      %529 = vdwg.mxu0
      %v530 = vld [vmem:[#allocation2 + $0x1] sm:$0xff]
      %v531 = vld [vmem:[#allocation2 + $0x9] sm:$0xff]
      %s532 = scalar_lea.vmem %s4, 72
      %v533 = vld [vmem:[%s532] sm:$0xff]
      %v534 = vld [vmem:[%s532 + $0x8] sm:$0xff]
      %v535 = vld [vmem:[%s532 + $0x10] sm:$0xff]
      %v536 = vld [vmem:[%s532 + $0x18] sm:$0xff]
      %v537 = vld [vmem:[%s532 + $0x20] sm:$0xff]
      %v538 = vld [vmem:[%s532 + $0x28] sm:$0xff]
      %v539 = vld [vmem:[%s532 + $0x30] sm:$0xff]
      %v540 = vld [vmem:[%s532 + $0x38] sm:$0xff]
      %v541 = vld [vmem:[%s532 + $0x40] sm:$0xff]
      %v543 = vsel %vm350, %v530, 0
      %v546 = vsel %vm350, %v531, 0
      %548 = vmatpush.msra.mxu0 0.0
      %549 = vmatpush.msra.mxu0 0.0
      %550 = vmatpush.msra.mxu0 0.0
      %551 = vmatpush.msra.mxu0 0.0
      %552 = vmatpush.msra.mxu0 0.0
      %553 = vmatpush.msra.mxu0 0.0
      %554 = vmatpush.msra.mxu0 0.0
      %555 = vmatpush.msra.mxu0 %v541
      %556 = vmatpush.msra.mxu0 %v540
      %557 = vmatpush.msra.mxu0 %v539
      %558 = vmatpush.msra.mxu0 %v538
      %559 = vmatpush.msra.mxu0 %v537
      %560 = vmatpush.msra.mxu0 %v536
      %561 = vmatpush.msra.mxu0 %v535
      %562 = vmatpush.msra.mxu0 %v534
      %563 = vmatpush.msra.mxu0 %v533
      %564 = vmatmul.f32.gmra.mxu0 %v543
      %v565 = vpop.f32.mrf.mxu0
      %v566 = vadd.f32 0.0, %v565
      %567 = vmatmul.f32.gmra.mxu0 %v546
      %v568 = vpop.f32.mrf.mxu0
      %v569 = vadd.f32 0.0, %v568
      %570 = vdwg.mxu0
      %v571 = vadd.f32 %v525, %v566
      %v572 = vadd.f32 %v528, %v569
      %v573 = vld [vmem:[#allocation3 + $0x1] sm:$0xff]
      %v574 = vld [vmem:[#allocation3 + $0x9] sm:$0xff]
      %s575 = scalar_lea.vmem %s5, 72
      %v576 = vld [vmem:[%s575] sm:$0xff]
      %v577 = vld [vmem:[%s575 + $0x8] sm:$0xff]
      %v578 = vld [vmem:[%s575 + $0x10] sm:$0xff]
      %v579 = vld [vmem:[%s575 + $0x18] sm:$0xff]
      %v580 = vld [vmem:[%s575 + $0x20] sm:$0xff]
      %v581 = vld [vmem:[%s575 + $0x28] sm:$0xff]
      %v582 = vld [vmem:[%s575 + $0x30] sm:$0xff]
      %v583 = vld [vmem:[%s575 + $0x38] sm:$0xff]
      %v584 = vld [vmem:[%s575 + $0x40] sm:$0xff]
      %v586 = vsel %vm350, %v573, 0
      %v589 = vsel %vm350, %v574, 0
      %591 = vmatpush.msra.mxu0 0.0
      %592 = vmatpush.msra.mxu0 0.0
      %593 = vmatpush.msra.mxu0 0.0
      %594 = vmatpush.msra.mxu0 0.0
      %595 = vmatpush.msra.mxu0 0.0
      %596 = vmatpush.msra.mxu0 0.0
      %597 = vmatpush.msra.mxu0 0.0
      %598 = vmatpush.msra.mxu0 %v584
      %599 = vmatpush.msra.mxu0 %v583
      %600 = vmatpush.msra.mxu0 %v582
      %601 = vmatpush.msra.mxu0 %v581
      %602 = vmatpush.msra.mxu0 %v580
      %603 = vmatpush.msra.mxu0 %v579
      %604 = vmatpush.msra.mxu0 %v578
      %605 = vmatpush.msra.mxu0 %v577
      %606 = vmatpush.msra.mxu0 %v576
      %607 = vmatmul.f32.gmra.mxu0 %v586
      %v608 = vpop.f32.mrf.mxu0
      %v609 = vadd.f32 0.0, %v608
      %610 = vmatmul.f32.gmra.mxu0 %v589
      %v611 = vpop.f32.mrf.mxu0
      %v612 = vadd.f32 0.0, %v611
      %613 = vdwg.mxu0
      %v614 = vadd.f32 %v571, %v609
      %v615 = vadd.f32 %v572, %v612
      %v616 = vld [vmem:[#allocation2 + $0x2] sm:$0xff]
      %v617 = vld [vmem:[#allocation2 + $0xa] sm:$0xff]
      %s618 = scalar_lea.vmem %s4, 144
      %v619 = vld [vmem:[%s618] sm:$0xff]
      %v620 = vld [vmem:[%s618 + $0x8] sm:$0xff]
      %v621 = vld [vmem:[%s618 + $0x10] sm:$0xff]
      %v622 = vld [vmem:[%s618 + $0x18] sm:$0xff]
      %v623 = vld [vmem:[%s618 + $0x20] sm:$0xff]
      %v624 = vld [vmem:[%s618 + $0x28] sm:$0xff]
      %v625 = vld [vmem:[%s618 + $0x30] sm:$0xff]
      %v626 = vld [vmem:[%s618 + $0x38] sm:$0xff]
      %v627 = vld [vmem:[%s618 + $0x40] sm:$0xff]
      %v629 = vsel %vm350, %v616, 0
      %v632 = vsel %vm350, %v617, 0
      %634 = vmatpush.msra.mxu0 0.0
      %635 = vmatpush.msra.mxu0 0.0
      %636 = vmatpush.msra.mxu0 0.0
      %637 = vmatpush.msra.mxu0 0.0
      %638 = vmatpush.msra.mxu0 0.0
      %639 = vmatpush.msra.mxu0 0.0
      %640 = vmatpush.msra.mxu0 0.0
      %641 = vmatpush.msra.mxu0 %v627
      %642 = vmatpush.msra.mxu0 %v626
      %643 = vmatpush.msra.mxu0 %v625
      %644 = vmatpush.msra.mxu0 %v624
      %645 = vmatpush.msra.mxu0 %v623
      %646 = vmatpush.msra.mxu0 %v622
      %647 = vmatpush.msra.mxu0 %v621
      %648 = vmatpush.msra.mxu0 %v620
      %649 = vmatpush.msra.mxu0 %v619
      %650 = vmatmul.f32.gmra.mxu0 %v629
      %v651 = vpop.f32.mrf.mxu0
      %v652 = vadd.f32 0.0, %v651
      %653 = vmatmul.f32.gmra.mxu0 %v632
      %v654 = vpop.f32.mrf.mxu0
      %v655 = vadd.f32 0.0, %v654
      %656 = vdwg.mxu0
      %v657 = vadd.f32 %v614, %v652
      %v658 = vadd.f32 %v615, %v655
      %v659 = vld [vmem:[#allocation3 + $0x2] sm:$0xff]
      %v660 = vld [vmem:[#allocation3 + $0xa] sm:$0xff]
      %s661 = scalar_lea.vmem %s5, 144
      %v662 = vld [vmem:[%s661] sm:$0xff]
      %v663 = vld [vmem:[%s661 + $0x8] sm:$0xff]
      %v664 = vld [vmem:[%s661 + $0x10] sm:$0xff]
      %v665 = vld [vmem:[%s661 + $0x18] sm:$0xff]
      %v666 = vld [vmem:[%s661 + $0x20] sm:$0xff]
      %v667 = vld [vmem:[%s661 + $0x28] sm:$0xff]
      %v668 = vld [vmem:[%s661 + $0x30] sm:$0xff]
      %v669 = vld [vmem:[%s661 + $0x38] sm:$0xff]
      %v670 = vld [vmem:[%s661 + $0x40] sm:$0xff]
      %v672 = vsel %vm350, %v659, 0
      %v675 = vsel %vm350, %v660, 0
      %677 = vmatpush.msra.mxu0 0.0
      %678 = vmatpush.msra.mxu0 0.0
      %679 = vmatpush.msra.mxu0 0.0
      %680 = vmatpush.msra.mxu0 0.0
      %681 = vmatpush.msra.mxu0 0.0
      %682 = vmatpush.msra.mxu0 0.0
      %683 = vmatpush.msra.mxu0 0.0
      %684 = vmatpush.msra.mxu0 %v670
      %685 = vmatpush.msra.mxu0 %v669
      %686 = vmatpush.msra.mxu0 %v668
      %687 = vmatpush.msra.mxu0 %v667
      %688 = vmatpush.msra.mxu0 %v666
      %689 = vmatpush.msra.mxu0 %v665
      %690 = vmatpush.msra.mxu0 %v664
      %691 = vmatpush.msra.mxu0 %v663
      %692 = vmatpush.msra.mxu0 %v662
      %693 = vmatmul.f32.gmra.mxu0 %v672
      %v694 = vpop.f32.mrf.mxu0
      %v695 = vadd.f32 0.0, %v694
      %696 = vmatmul.f32.gmra.mxu0 %v675
      %v697 = vpop.f32.mrf.mxu0
      %v698 = vadd.f32 0.0, %v697
      %699 = vdwg.mxu0
      %v700 = vadd.f32 %v657, %v695
      %v701 = vadd.f32 %v658, %v698
      %v702 = vld [vmem:[%s6] sm:$0x1]
      %v704 = vperm.slane %v702, 0
      %v706 = vadd.f32 %v700, %v704
      %v707 = vadd.f32 %v701, %v704
      %v708 = vmax.f32 %v706, 0.0
      %v709 = vmax.f32 %v707, 0.0
      %vm712 = vcmask 1040384
      %v713 = vrot.slane %v708, 7
      %v714 = vrot.slane %v709, 7
      %v715 = vsel %vm712, %v713, %v714
      %716 = vrot.lane.b32.xlu0 %v713, 8
      %v717 = vpop.permute.xlu0 %716
      %718 = vrot.lane.b32.xlu0 %v715, 8
      %v719 = vpop.permute.xlu0 %718
      %720 = vrot.lane.b32.xlu0 %v714, 8
      %v721 = vpop.permute.xlu0 %720
      %vm725 = vcmask 1047617
      %726 = vst.msk [vmem:[#allocation4] sm:$0xfe] %vm725, %v717
      %vm727 = vcmask 64513
      %728 = vst.msk [vmem:[#allocation4 + $0x8] sm:$0xfe] %vm727, %v717
      %vm729 = vcmask 1047616
      %730 = vst.msk [vmem:[#allocation4 + $0x10] sm:$0xff] %vm729, %v719
      %731 = vst.msk [vmem:[#allocation4 + $0x18] sm:$0xff] %vm410, %v719
      %vm732 = vcmask 1040448
      %733 = vst.msk [vmem:[#allocation4 + $0x20] sm:$0x1] %vm732, %v721
      %vm734 = vcmask 57344
      %735 = vst.msk [vmem:[#allocation4 + $0x28] sm:$0x1] %vm734, %v721
      %v736 = vld [vmem:[#allocation4] sm:$0xff]
      %v737 = vld [vmem:[#allocation4 + $0x8] sm:$0xff]
      %v738 = vld [vmem:[#allocation4 + $0x10] sm:$0xff]
      %v739 = vld [vmem:[#allocation4 + $0x18] sm:$0xff]
      %v740 = vld [vmem:[%s7] sm:$0xff]
      %v741 = vld [vmem:[%s7 + $0x8] sm:$0xff]
      %v742 = vld [vmem:[%s7 + $0x10] sm:$0xff]
      %v743 = vld [vmem:[%s7 + $0x18] sm:$0xff]
      %v744 = vld [vmem:[%s7 + $0x20] sm:$0xff]
      %v745 = vld [vmem:[%s7 + $0x28] sm:$0xff]
      %v746 = vld [vmem:[%s7 + $0x30] sm:$0xff]
      %v747 = vld [vmem:[%s7 + $0x38] sm:$0xff]
      %v748 = vld [vmem:[%s7 + $0x40] sm:$0xff]
      %v749 = vld [vmem:[%s7 + $0x48] sm:$0xff]
      %v750 = vld [vmem:[%s7 + $0x50] sm:$0xff]
      %v751 = vld [vmem:[%s7 + $0x58] sm:$0xff]
      %v752 = vld [vmem:[%s7 + $0x60] sm:$0xff]
      %v753 = vld [vmem:[%s7 + $0x68] sm:$0xff]
      %v754 = vld [vmem:[%s7 + $0x70] sm:$0xff]
      %v755 = vld [vmem:[%s7 + $0x78] sm:$0xff]
      %v756 = vld [vmem:[%s7 + $0x80] sm:$0xff]
      %v757 = vld [vmem:[%s7 + $0x88] sm:$0xff]
      %v758 = vld [vmem:[#allocation4] sm:$0xfe]
      %v759 = vld [vmem:[#allocation4 + $0x8] sm:$0xfe]
      %v760 = vld [vmem:[#allocation4 + $0x20] sm:$0x1]
      %v761 = vld [vmem:[#allocation4 + $0x28] sm:$0x1]
      %s762 = scalar_lea.vmem %s7, 144
      %v763 = vld [vmem:[%s762] sm:$0xff]
      %v764 = vld [vmem:[%s762 + $0x8] sm:$0xff]
      %v765 = vld [vmem:[%s762 + $0x10] sm:$0xff]
      %v766 = vld [vmem:[%s762 + $0x18] sm:$0xff]
      %v767 = vld [vmem:[%s762 + $0x20] sm:$0xff]
      %v768 = vld [vmem:[%s762 + $0x28] sm:$0xff]
      %v769 = vld [vmem:[%s762 + $0x30] sm:$0xff]
      %v770 = vld [vmem:[%s762 + $0x38] sm:$0xff]
      %v771 = vld [vmem:[%s762 + $0x40] sm:$0xff]
      %v772 = vld [vmem:[%s762 + $0x48] sm:$0xff]
      %v773 = vld [vmem:[%s762 + $0x50] sm:$0xff]
      %v774 = vld [vmem:[%s762 + $0x58] sm:$0xff]
      %v775 = vld [vmem:[%s762 + $0x60] sm:$0xff]
      %v776 = vld [vmem:[%s762 + $0x68] sm:$0xff]
      %v777 = vld [vmem:[%s762 + $0x70] sm:$0xff]
      %v778 = vld [vmem:[%s762 + $0x78] sm:$0xff]
      %v779 = vld [vmem:[%s762 + $0x80] sm:$0xff]
      %v780 = vld [vmem:[%s762 + $0x88] sm:$0xff]
      %vm787 = vcmask 1046528
      %v788 = vrot.slane %v758, 1
      %v789 = vrot.slane %v738, 1
      %v790 = vsel %vm787, %v788, %v789
      %v791 = vrot.slane %v759, 1
      %v792 = vrot.slane %v739, 1
      %v793 = vsel %vm787, %v791, %v792
      %v794 = vrot.slane %v760, 1
      %v795 = vsel %vm787, %v789, %v794
      %v796 = vrot.slane %v761, 1
      %v797 = vsel %vm787, %v792, %v796
      %v800 = vsel %vm359, %v793, 0
      %v802 = vsel %vm359, %v797, 0
      %804 = vmatpush.msra.mxu0 %v778
      %805 = vmatpush.msra.mxu0 %v777
      %806 = vmatpush.msra.mxu0 %v776
      %807 = vmatpush.msra.mxu0 %v775
      %808 = vmatpush.msra.mxu0 %v774
      %809 = vmatpush.msra.mxu0 %v773
      %810 = vmatpush.msra.mxu0 %v772
      %811 = vmatpush.msra.mxu0 %v771
      %812 = vmatpush.msra.mxu0 %v770
      %813 = vmatpush.msra.mxu0 %v769
      %814 = vmatpush.msra.mxu0 %v768
      %815 = vmatpush.msra.mxu0 %v767
      %816 = vmatpush.msra.mxu0 %v766
      %817 = vmatpush.msra.mxu0 %v765
      %818 = vmatpush.msra.mxu0 %v764
      %819 = vmatpush.msra.mxu0 %v763
      %820 = vmatmul.f32.gmra.mxu0 %v790
      %v821 = vpop.f32.mrf.mxu0
      %v822 = vadd.f32 0.0, %v821
      %823 = vmatmul.f32.gmra.mxu0 %v795
      %v824 = vpop.f32.mrf.mxu0
      %v825 = vadd.f32 0.0, %v824
      %826 = vdwg.mxu0
      %827 = vmatpush.msra.mxu0 0.0
      %828 = vmatpush.msra.mxu0 0.0
      %829 = vmatpush.msra.mxu0 0.0
      %830 = vmatpush.msra.mxu0 0.0
      %831 = vmatpush.msra.mxu0 0.0
      %832 = vmatpush.msra.mxu0 0.0
      %833 = vmatpush.msra.mxu0 0.0
      %834 = vmatpush.msra.mxu0 0.0
      %835 = vmatpush.msra.mxu0 0.0
      %836 = vmatpush.msra.mxu0 0.0
      %837 = vmatpush.msra.mxu0 0.0
      %838 = vmatpush.msra.mxu0 0.0
      %839 = vmatpush.msra.mxu0 0.0
      %840 = vmatpush.msra.mxu0 0.0
      %841 = vmatpush.msra.mxu0 %v780
      %842 = vmatpush.msra.mxu0 %v779
      %843 = vmatmul.f32.gmra.mxu0 %v800
      %v844 = vpop.f32.mrf.mxu0
      %v845 = vadd.f32 %v822, %v844
      %846 = vmatmul.f32.gmra.mxu0 %v802
      %v847 = vpop.f32.mrf.mxu0
      %v848 = vadd.f32 %v825, %v847
      %849 = vdwg.mxu0
      %v851 = vsel %vm359, %v737, 0
      %v853 = vsel %vm359, %v739, 0
      %855 = vmatpush.msra.mxu0 %v755
      %856 = vmatpush.msra.mxu0 %v754
      %857 = vmatpush.msra.mxu0 %v753
      %858 = vmatpush.msra.mxu0 %v752
      %859 = vmatpush.msra.mxu0 %v751
      %860 = vmatpush.msra.mxu0 %v750
      %861 = vmatpush.msra.mxu0 %v749
      %862 = vmatpush.msra.mxu0 %v748
      %863 = vmatpush.msra.mxu0 %v747
      %864 = vmatpush.msra.mxu0 %v746
      %865 = vmatpush.msra.mxu0 %v745
      %866 = vmatpush.msra.mxu0 %v744
      %867 = vmatpush.msra.mxu0 %v743
      %868 = vmatpush.msra.mxu0 %v742
      %869 = vmatpush.msra.mxu0 %v741
      %870 = vmatpush.msra.mxu0 %v740
      %871 = vmatmul.f32.gmra.mxu0 %v736
      %v872 = vpop.f32.mrf.mxu0
      %v873 = vadd.f32 %v845, %v872
      %874 = vmatmul.f32.gmra.mxu0 %v738
      %v875 = vpop.f32.mrf.mxu0
      %v876 = vadd.f32 %v848, %v875
      %877 = vdwg.mxu0
      %878 = vmatpush.msra.mxu0 0.0
      %879 = vmatpush.msra.mxu0 0.0
      %880 = vmatpush.msra.mxu0 0.0
      %881 = vmatpush.msra.mxu0 0.0
      %882 = vmatpush.msra.mxu0 0.0
      %883 = vmatpush.msra.mxu0 0.0
      %884 = vmatpush.msra.mxu0 0.0
      %885 = vmatpush.msra.mxu0 0.0
      %886 = vmatpush.msra.mxu0 0.0
      %887 = vmatpush.msra.mxu0 0.0
      %888 = vmatpush.msra.mxu0 0.0
      %889 = vmatpush.msra.mxu0 0.0
      %890 = vmatpush.msra.mxu0 0.0
      %891 = vmatpush.msra.mxu0 0.0
      %892 = vmatpush.msra.mxu0 %v757
      %893 = vmatpush.msra.mxu0 %v756
      %894 = vmatmul.f32.gmra.mxu0 %v851
      %v895 = vpop.f32.mrf.mxu0
      %v896 = vadd.f32 %v873, %v895
      %897 = vmatmul.f32.gmra.mxu0 %v853
      %v898 = vpop.f32.mrf.mxu0
      %v899 = vadd.f32 %v876, %v898
      %900 = vdwg.mxu0
      %v901 = vld [vmem:[#allocation4] sm:$0xfc]
      %v902 = vld [vmem:[#allocation4 + $0x8] sm:$0xfc]
      %v903 = vld [vmem:[#allocation4 + $0x20] sm:$0x3]
      %v904 = vld [vmem:[#allocation4 + $0x28] sm:$0x3]
      %s905 = scalar_lea.vmem %s7, 288
      %v906 = vld [vmem:[%s905] sm:$0xff]
      %v907 = vld [vmem:[%s905 + $0x8] sm:$0xff]
      %v908 = vld [vmem:[%s905 + $0x10] sm:$0xff]
      %v909 = vld [vmem:[%s905 + $0x18] sm:$0xff]
      %v910 = vld [vmem:[%s905 + $0x20] sm:$0xff]
      %v911 = vld [vmem:[%s905 + $0x28] sm:$0xff]
      %v912 = vld [vmem:[%s905 + $0x30] sm:$0xff]
      %v913 = vld [vmem:[%s905 + $0x38] sm:$0xff]
      %v914 = vld [vmem:[%s905 + $0x40] sm:$0xff]
      %v915 = vld [vmem:[%s905 + $0x48] sm:$0xff]
      %v916 = vld [vmem:[%s905 + $0x50] sm:$0xff]
      %v917 = vld [vmem:[%s905 + $0x58] sm:$0xff]
      %v918 = vld [vmem:[%s905 + $0x60] sm:$0xff]
      %v919 = vld [vmem:[%s905 + $0x68] sm:$0xff]
      %v920 = vld [vmem:[%s905 + $0x70] sm:$0xff]
      %v921 = vld [vmem:[%s905 + $0x78] sm:$0xff]
      %v922 = vld [vmem:[%s905 + $0x80] sm:$0xff]
      %v923 = vld [vmem:[%s905 + $0x88] sm:$0xff]
      %vm928 = vcmask 1045504
      %v929 = vrot.slane %v901, 2
      %v930 = vrot.slane %v738, 2
      %v931 = vsel %vm928, %v929, %v930
      %v932 = vrot.slane %v902, 2
      %v933 = vrot.slane %v739, 2
      %v934 = vsel %vm928, %v932, %v933
      %v935 = vrot.slane %v903, 2
      %v936 = vsel %vm928, %v930, %v935
      %v937 = vrot.slane %v904, 2
      %v938 = vsel %vm928, %v933, %v937
      %v941 = vsel %vm359, %v934, 0
      %v943 = vsel %vm359, %v938, 0
      %945 = vmatpush.msra.mxu0 %v921
      %946 = vmatpush.msra.mxu0 %v920
      %947 = vmatpush.msra.mxu0 %v919
      %948 = vmatpush.msra.mxu0 %v918
      %949 = vmatpush.msra.mxu0 %v917
      %950 = vmatpush.msra.mxu0 %v916
      %951 = vmatpush.msra.mxu0 %v915
      %952 = vmatpush.msra.mxu0 %v914
      %953 = vmatpush.msra.mxu0 %v913
      %954 = vmatpush.msra.mxu0 %v912
      %955 = vmatpush.msra.mxu0 %v911
      %956 = vmatpush.msra.mxu0 %v910
      %957 = vmatpush.msra.mxu0 %v909
      %958 = vmatpush.msra.mxu0 %v908
      %959 = vmatpush.msra.mxu0 %v907
      %960 = vmatpush.msra.mxu0 %v906
      %961 = vmatmul.f32.gmra.mxu0 %v931
      %v962 = vpop.f32.mrf.mxu0
      %v963 = vadd.f32 0.0, %v962
      %964 = vmatmul.f32.gmra.mxu0 %v936
      %v965 = vpop.f32.mrf.mxu0
      %v966 = vadd.f32 0.0, %v965
      %967 = vdwg.mxu0
      %968 = vmatpush.msra.mxu0 0.0
      %969 = vmatpush.msra.mxu0 0.0
      %970 = vmatpush.msra.mxu0 0.0
      %971 = vmatpush.msra.mxu0 0.0
      %972 = vmatpush.msra.mxu0 0.0
      %973 = vmatpush.msra.mxu0 0.0
      %974 = vmatpush.msra.mxu0 0.0
      %975 = vmatpush.msra.mxu0 0.0
      %976 = vmatpush.msra.mxu0 0.0
      %977 = vmatpush.msra.mxu0 0.0
      %978 = vmatpush.msra.mxu0 0.0
      %979 = vmatpush.msra.mxu0 0.0
      %980 = vmatpush.msra.mxu0 0.0
      %981 = vmatpush.msra.mxu0 0.0
      %982 = vmatpush.msra.mxu0 %v923
      %983 = vmatpush.msra.mxu0 %v922
      %984 = vmatmul.f32.gmra.mxu0 %v941
      %v985 = vpop.f32.mrf.mxu0
      %v986 = vadd.f32 %v963, %v985
      %987 = vmatmul.f32.gmra.mxu0 %v943
      %v988 = vpop.f32.mrf.mxu0
      %v989 = vadd.f32 %v966, %v988
      %990 = vdwg.mxu0
      %v991 = vadd.f32 %v896, %v986
      %v992 = vadd.f32 %v899, %v989
      %v993 = vld [vmem:[%s8] sm:$0x1]
      %v995 = vperm.slane %v993, 0
      %v997 = vadd.f32 %v991, %v995
      %v998 = vadd.f32 %v992, %v995
      %v999 = vmax.f32 %v997, 0.0
      %v1000 = vmax.f32 %v998, 0.0
      %1001 = vst [vmem:[%s349] sm:$0xff] %v999
      %1002 = vst [vmem:[%s349 + $0x8] sm:$0xff] %v1000
      %p1003 = scmp.lt.s32.totalorder %s20, 1
      %s1004 = scalar_select %p1003, %s20, 1
      %s1005 = smul.addr %s1004, 2
      %s1006 = smul.addr %s1005, 8
      %s1007 = scalar_lea.vmem %s9, %s1006
      // Predicated region
      $region57: #{unet_up_forward.1} parent=55 // pred_check
        %p1008 = pneg %p237
      $region58: #{unet_up_forward.1} parent=55 // pred_check_branch
        %1010 = sbr.rel (%p1008) target = $region60
      $region59: #{unet_up_forward.1} parent=55 // pred_region
        _
      $region60: #{unet_up_forward.1} parent=55 // pred_fallthru
        _
    $region56: #{unet_up_forward.1} parent=5 // pred_fallthru
      _
    %p1011 = scmp.le.s32.totalorder 2, %s15
    // Predicated region
    $region61: #{unet_up_forward.1} parent=5 // pred_check
      %p1012 = pneg %p1011
    $region62: #{unet_up_forward.1} parent=5 // pred_check_branch
      %1014 = sbr.rel (%p1012) target = $region64
    $region63: #{unet_up_forward.1} parent=5 // pred_region
      %s1015 = ssub.s32 %s15, 2
      // Predicated region
      $region65: #{unet_up_forward.1} parent=63 // pred_check
        %p1016 = pneg %p243
      $region66: #{unet_up_forward.1} parent=63 // pred_check_branch
        %1018 = sbr.rel (%p1016) target = $region68
      $region67: #{unet_up_forward.1} parent=63 // pred_region
        %p1019 = scmp.lt.s32.totalorder %s21, 1
        %s1020 = scalar_select %p1019, %s21, 1
        %s1021 = smul.addr %s1020, 2
        %s1022 = smul.addr %s1021, 8
        %s1023 = scalar_lea.vmem %s9, %s1022
      $region68: #{unet_up_forward.1} parent=63 // pred_fallthru
        _
    $region64: #{unet_up_forward.1} parent=5 // pred_fallthru
      _
  $region6: #{unet_up_forward.1} parent=0 // loop_footer
    %s19 = sadd.s32 1, %s15
  $region7: #{unet_up_forward.1} parent=0 // loop_footer_branch
    %14 = sbr.rel target = $region3
  $region8: #{unet_up_forward.1} parent=0 // loop_exit
    _

</llo_original>
